<compile_context>
chip_gen: v7x
topology: tpu7x:2x2x1
jax: 0.10.0
libtpu: 0.0.40
codegen_flags: <defaults>
</compile_context>

<pallas_src>
import jax
import jax.numpy as jnp
from jax.experimental import pallas as pl
from jax.experimental.pallas import tpu as pltpu


def _round_up(x, m):
    return (x + m - 1) // m * m


def _mlp_tail(h1_acc, b1_ref, w2_ref, b2_ref, w3_ref, b3_ref, out_ref):
    """relu(h1_acc + b1) @ W2 -> relu(+b2) @ W3 -> +b3, f32 elementwise."""
    h1 = jnp.maximum(h1_acc + b1_ref[...], 0.0)
    h2 = jnp.dot(h1.astype(jnp.bfloat16), w2_ref[...],
                 preferred_element_type=jnp.float32)
    h2 = jnp.maximum(h2 + b2_ref[...], 0.0)
    h3 = jnp.dot(h2.astype(jnp.bfloat16), w3_ref[...],
                 preferred_element_type=jnp.float32)
    out_ref[...] = (h3 + b3_ref[...]).astype(out_ref.dtype)


def class_encoder_kernel(x_ref, w1_ref, b1_ref, w2_ref, b2_ref, w3_ref, b3_ref,
                         out_ref):
    """Single layer-1 tile: whole W1 is VMEM-resident across grid steps."""
    h1_acc = jnp.dot(x_ref[...].astype(jnp.bfloat16), w1_ref[...],
                     preferred_element_type=jnp.float32)
    _mlp_tail(h1_acc, b1_ref, w2_ref, b2_ref, w3_ref, b3_ref, out_ref)


def class_encoder_kernel_ktiled(x_ref, w1_ref, b1_ref, w2_ref, b2_ref, w3_ref,
                                b3_ref, out_ref, acc_ref):
    """K-tiled layer 1: accumulate x@W1 over the last ('arbitrary') grid axis;
    run layers 2/3 and the store only on the final K step."""
    k = pl.program_id(1)

    @pl.when(k == 0)
    def _init():
        acc_ref[...] = jnp.zeros_like(acc_ref)

    acc_ref[...] += jnp.dot(x_ref[...].astype(jnp.bfloat16), w1_ref[...],
                            preferred_element_type=jnp.float32)

    @pl.when(k == pl.num_programs(1) - 1)
    def _finish():
        _mlp_tail(acc_ref[...], b1_ref, w2_ref, b2_ref, w3_ref, b3_ref, out_ref)


def class_encoder_forward(x, params):
    """x: (B, num_classes) float32 or bfloat16.  params from pack_params."""
    B, C = x.shape
    w1, b1 = params["w1"], params["b1"]   # (C_w, 1024) bf16, (1, 1024) f32
    w2, b2 = params["w2"], params["b2"]   # (1024, 512) bf16, (1, 512)  f32
    w3, b3 = params["w3"], params["b3"]   # (512, E_pad) bf16, (1, E_pad) f32
    E = params["embedding_dim"]
    E_pad = w3.shape[1]
    C_w = w1.shape[0]                     # possibly zero-row-padded for K tiling
    tk = params["tk"] or C_w              # layer-1 contraction tile
    assert C_w % tk == 0
    kt = C_w // tk

    if C_w != C:
        x = jnp.pad(x, ((0, 0), (0, C_w - C)))

    # Batch tiling (see header comment).
    if B <= 128:
        TM = _round_up(B, 8)
    elif B <= 512:
        TM = _round_up(-(-B // 2), 8)     # two tiles -> v7x second TC usable
    else:
        TM = 256                          # full-height MXU pushes on v6e/v7x
    B_pad = _round_up(B, TM)
    if B_pad != B:
        x = jnp.pad(x, ((0, B_pad - B), (0, 0)))
    grid = (B_pad // TM, kt)

    def _spec(shape, index_map, single_buffer=False):
        if single_buffer:
            # Constant-index blocks are DMA'd once; double-buffering them
            # would only double their VMEM footprint.
            return pl.BlockSpec(shape, index_map,
                                pipeline_mode=pl.Buffered(buffer_count=1))
        return pl.BlockSpec(shape, index_map)

    const = lambda a: _spec(a.shape, lambda i, k: (0, 0), single_buffer=True)

    if kt == 1:
        kernel = class_encoder_kernel
        scratch_shapes = []
        w1_spec = const(w1)
        w1_vmem = w1.size * 2
    else:
        kernel = class_encoder_kernel_ktiled
        scratch_shapes = [pltpu.VMEM((TM, 1024), jnp.float32)]
        w1_spec = _spec((tk, 1024), lambda i, k: (k, 0))   # streamed, 2-buffered
        w1_vmem = 2 * tk * 1024 * 2

    # Explicit VMEM budget: weights/biases + double-buffered x/out tiles +
    # accumulator + f32 intermediates + headroom.
    vmem_bytes = (
        w1_vmem + w2.size * 2 + w3.size * 2
        + (b1.size + b2.size + b3.size) * 4
        + 2 * TM * tk * x.dtype.itemsize
        + 2 * TM * E_pad * 4
        + TM * 1024 * 4
        + TM * (1024 + 1024 + 512 + 512 + 2 * E_pad) * 4
        + (4 << 20))
    vmem_bytes = int(min(vmem_bytes, 100 * 1024 * 1024))

    flops = 2 * B_pad * (C_w * 1024 + 1024 * 512 + 512 * E_pad)
    bytes_accessed = int(B_pad * C_w * x.dtype.itemsize
                         + (w1.size + w2.size + w3.size) * 2
                         + (b1.size + b2.size + b3.size) * 4
                         + B_pad * E_pad * 4)

    out = pl.pallas_call(
        kernel,
        out_shape=jax.ShapeDtypeStruct((B_pad, E_pad), jnp.float32),
        grid=grid,
        in_specs=[
            _spec((TM, tk), lambda i, k: (i, k)),
            w1_spec, const(b1),
            const(w2), const(b2),
            const(w3), const(b3),
        ],
        out_specs=pl.BlockSpec((TM, E_pad), lambda i, k: (i, 0)),
        scratch_shapes=scratch_shapes,
        compiler_params=pltpu.CompilerParams(
            dimension_semantics=("parallel", "arbitrary"),
            vmem_limit_bytes=vmem_bytes),
        cost_estimate=pl.CostEstimate(
            flops=flops, transcendentals=0, bytes_accessed=bytes_accessed),
    )(x, w1, b1, w2, b2, w3, b3)

    if B_pad != B or E_pad != E:
        out = out[:B, :E]   # only pay the slice when padding was added
    return out


def init_params(key, num_classes, embedding_dim=512):
    """nn.Linear-style init (U(+-1/sqrt(fan_in))), f32 master weights.

    Weights stored transposed to (in, out); biases (1, out)."""
    dims = [(num_classes, 1024), (1024, 512), (512, embedding_dim)]
    params = {"embedding_dim": embedding_dim, "num_classes": num_classes}
    for i, (fan_in, fan_out) in enumerate(dims, start=1):
        key, kw, kb = jax.random.split(key, 3)
        bound = 1.0 / float(fan_in) ** 0.5
        params[f"w{i}"] = jax.random.uniform(kw, (fan_in, fan_out),
                                             jnp.float32, -bound, bound)
        params[f"b{i}"] = jax.random.uniform(kb, (1, fan_out),
                                             jnp.float32, -bound, bound)
    return params


# Above this W1 (bf16) is K-tiled instead of kept fully VMEM resident
# (v7x has only 64 MiB physical VMEM; default scoped limits are lower still).
_W1_RESIDENT_MAX_BYTES = 12 * 1024 * 1024
_DEFAULT_TK = 512


def pack_params(params, tk=None):
    """Cast weights to bf16, pad fc3 to a lane-dense multiple of 128, and
    (for large num_classes, or when `tk` is forced) zero-pad W1 rows to a
    multiple of the layer-1 K tile."""
    C = params["num_classes"]
    E = params["embedding_dim"]
    e_pad = _round_up(E, 128)
    if tk is None and C * 1024 * 2 > _W1_RESIDENT_MAX_BYTES:
        tk = _DEFAULT_TK
    if tk is not None:
        assert tk % 128 == 0, "layer-1 K tile must be a multiple of 128"

    w1 = params["w1"]
    if tk is not None:
        c_pad = _round_up(C, tk)
        if c_pad != C:
            w1 = jnp.pad(w1, ((0, c_pad - C), (0, 0)))

    w3, b3 = params["w3"], params["b3"]
    if e_pad != E:
        w3 = jnp.pad(w3, ((0, 0), (0, e_pad - E)))
        b3 = jnp.pad(b3, ((0, 0), (0, e_pad - E)))

    return {
        "embedding_dim": E, "num_classes": C, "tk": tk,
        "w1": w1.astype(jnp.bfloat16), "b1": params["b1"],
        "w2": params["w2"].astype(jnp.bfloat16), "b2": params["b2"],
        "w3": w3.astype(jnp.bfloat16), "b3": b3,
    }


def _reference_f32(x, params):
    """Pure-f32 reference mirroring the PyTorch ClassEncoder."""
    h = jnp.maximum(x @ params["w1"] + params["b1"], 0.0)
    h = jnp.maximum(h @ params["w2"] + params["b2"], 0.0)
    return h @ params["w3"] + params["b3"]


def _reference_bf16(x, packed):
    """Reference mirroring the kernel's own math (bf16 weights, f32 accum)."""
    c_w = packed["w1"].shape[0]
    if c_w != x.shape[1]:
        x = jnp.pad(x, ((0, 0), (0, c_w - x.shape[1])))
    h = jnp.dot(x.astype(jnp.bfloat16), packed["w1"],
                preferred_element_type=jnp.float32) + packed["b1"]
    h = jnp.maximum(h, 0.0)
    h = jnp.dot(h.astype(jnp.bfloat16), packed["w2"],
                preferred_element_type=jnp.float32) + packed["b2"]
    h = jnp.maximum(h, 0.0)
    h = jnp.dot(h.astype(jnp.bfloat16), packed["w3"],
                preferred_element_type=jnp.float32) + packed["b3"]
    return h[:, :packed["embedding_dim"]]


def _check(out, x, params, packed, batch, embedding_dim):
    assert out.shape == (batch, embedding_dim), out.shape
    ref_k = _reference_bf16(x, packed)           # kernel-math mirror (tight)
    assert jnp.allclose(out, ref_k, atol=1e-3, rtol=1e-3), \
        float(jnp.max(jnp.abs(out - ref_k)))
    ref_m = _reference_f32(x, params)            # original f32 module (loose)
    assert jnp.allclose(out, ref_m, atol=3e-2, rtol=5e-2), \
        float(jnp.max(jnp.abs(out - ref_m)))


if __name__ == "__main__":
    key = jax.random.PRNGKey(0)

    # --- Test 1: small shapes, single layer-1 tile, E padded 64 -> 128. -----
    num_classes, embedding_dim, batch = 16, 64, 8
    key, kp, kx = jax.random.split(key, 3)
    params = init_params(kp, num_classes, embedding_dim)
    packed = pack_params(params)
    labels = jax.random.randint(kx, (batch,), 0, num_classes)
    x = jax.nn.one_hot(labels, num_classes, dtype=jnp.float32)

    out = class_encoder_forward(x, packed)
    jax.block_until_ready(out)
    _check(out, x, params, packed, batch, embedding_dim)

    # --- Test 2: forced K-tiled layer 1 + multi-tile batch, grid=(2, 3). ----
    num_classes, embedding_dim, batch = 384, 512, 160
    key, kp, kx = jax.random.split(key, 3)
    params = init_params(kp, num_classes, embedding_dim)
    packed = pack_params(params, tk=128)   # exercise the K-tiled path at small C
    labels = jax.random.randint(kx, (batch,), 0, num_classes)
    x = jax.nn.one_hot(labels, num_classes, dtype=jnp.float32)

    out = class_encoder_forward(x, packed)
    jax.block_until_ready(out)
    _check(out, x, params, packed, batch, embedding_dim)

    print("KERNEL_OK")
</pallas_src>

<mosaic_0001>
module attributes {stable_mosaic.version = 11 : i64} {
  func.func @class_encoder_kernel(%arg0: i32, %arg1: i32, %arg2: memref<8x16xf32, #tpu.memory_space<vmem>>, %arg3: memref<16x1024xbf16, #tpu.memory_space<vmem>>, %arg4: memref<1x1024xf32, #tpu.memory_space<vmem>>, %arg5: memref<1024x512xbf16, #tpu.memory_space<vmem>>, %arg6: memref<1x512xf32, #tpu.memory_space<vmem>>, %arg7: memref<512x128xbf16, #tpu.memory_space<vmem>>, %arg8: memref<1x128xf32, #tpu.memory_space<vmem>>, %arg9: memref<8x128xf32, #tpu.memory_space<vmem>>) attributes {dimension_semantics = [#tpu.dimension_semantics<parallel>, #tpu.dimension_semantics<arbitrary>], iteration_bounds = array<i64: 1, 1>, scalar_prefetch = 0 : i64, scratch_operands = 0 : i64, tpu.core_type = #tpu.core_type<tc>, window_params = [{transform_indices = @transform_0, window_bounds = array<i64: 8, 16>}, {pipeline_mode = #tpu.pipeline_mode<synchronous>, transform_indices = @transform_1, window_bounds = array<i64: 16, 1024>}, {pipeline_mode = #tpu.pipeline_mode<synchronous>, transform_indices = @transform_2, window_bounds = array<i64: 1, 1024>}, {pipeline_mode = #tpu.pipeline_mode<synchronous>, transform_indices = @transform_3, window_bounds = array<i64: 1024, 512>}, {pipeline_mode = #tpu.pipeline_mode<synchronous>, transform_indices = @transform_4, window_bounds = array<i64: 1, 512>}, {pipeline_mode = #tpu.pipeline_mode<synchronous>, transform_indices = @transform_5, window_bounds = array<i64: 512, 128>}, {pipeline_mode = #tpu.pipeline_mode<synchronous>, transform_indices = @transform_6, window_bounds = array<i64: 1, 128>}, {transform_indices = @transform_7, window_bounds = array<i64: 8, 128>}]} {
    %c0 = arith.constant 0 : index
    %c0_0 = arith.constant 0 : index
    %0 = vector.load %arg2[%c0, %c0_0] : memref<8x16xf32, #tpu.memory_space<vmem>>, vector<8x16xf32>
    %1 = arith.truncf %0 : vector<8x16xf32> to vector<8x16xbf16>
    %c0_1 = arith.constant 0 : index
    %c0_2 = arith.constant 0 : index
    %2 = vector.load %arg3[%c0_1, %c0_2] : memref<16x1024xbf16, #tpu.memory_space<vmem>>, vector<16x1024xbf16>
    %cst = arith.constant dense<0.000000e+00> : vector<8x1024xf32>
    %3 = tpu.matmul %1, %2, %cst {dimension_numbers = #tpu.dot_dimension_numbers<[1], [0], [0], [1], [0, 0, 1, 1], [], []>} : vector<8x16xbf16>, vector<16x1024xbf16>, vector<8x1024xf32> -> vector<8x1024xf32>
    %c0_3 = arith.constant 0 : index
    %c0_4 = arith.constant 0 : index
    %4 = vector.load %arg4[%c0_3, %c0_4] : memref<1x1024xf32, #tpu.memory_space<vmem>>, vector<1x1024xf32>
    %5 = vector.broadcast %4 : vector<1x1024xf32> to vector<8x1024xf32>
    %6 = arith.addf %3, %5 : vector<8x1024xf32>
    %cst_5 = arith.constant 0.000000e+00 : f32
    %7 = vector.broadcast %cst_5 : f32 to vector<8x1024xf32>
    %8 = arith.maximumf %6, %7 : vector<8x1024xf32>
    %9 = arith.truncf %8 : vector<8x1024xf32> to vector<8x1024xbf16>
    %c0_6 = arith.constant 0 : index
    %c0_7 = arith.constant 0 : index
    %10 = vector.load %arg5[%c0_6, %c0_7] : memref<1024x512xbf16, #tpu.memory_space<vmem>>, vector<1024x512xbf16>
    %cst_8 = arith.constant dense<0.000000e+00> : vector<8x512xf32>
    %11 = tpu.matmul %9, %10, %cst_8 {dimension_numbers = #tpu.dot_dimension_numbers<[1], [0], [0], [1], [0, 0, 1, 1], [], []>} : vector<8x1024xbf16>, vector<1024x512xbf16>, vector<8x512xf32> -> vector<8x512xf32>
    %c0_9 = arith.constant 0 : index
    %c0_10 = arith.constant 0 : index
    %12 = vector.load %arg6[%c0_9, %c0_10] : memref<1x512xf32, #tpu.memory_space<vmem>>, vector<1x512xf32>
    %13 = vector.broadcast %12 : vector<1x512xf32> to vector<8x512xf32>
    %14 = arith.addf %11, %13 : vector<8x512xf32>
    %cst_11 = arith.constant 0.000000e+00 : f32
    %15 = vector.broadcast %cst_11 : f32 to vector<8x512xf32>
    %16 = arith.maximumf %14, %15 : vector<8x512xf32>
    %17 = arith.truncf %16 : vector<8x512xf32> to vector<8x512xbf16>
    %c0_12 = arith.constant 0 : index
    %c0_13 = arith.constant 0 : index
    %18 = vector.load %arg7[%c0_12, %c0_13] : memref<512x128xbf16, #tpu.memory_space<vmem>>, vector<512x128xbf16>
    %cst_14 = arith.constant dense<0.000000e+00> : vector<8x128xf32>
    %19 = tpu.matmul %17, %18, %cst_14 {dimension_numbers = #tpu.dot_dimension_numbers<[1], [0], [0], [1], [0, 0, 1, 1], [], []>} : vector<8x512xbf16>, vector<512x128xbf16>, vector<8x128xf32> -> vector<8x128xf32>
    %c0_15 = arith.constant 0 : index
    %c0_16 = arith.constant 0 : index
    %20 = vector.load %arg8[%c0_15, %c0_16] : memref<1x128xf32, #tpu.memory_space<vmem>>, vector<1x128xf32>
    %21 = vector.broadcast %20 : vector<1x128xf32> to vector<8x128xf32>
    %22 = arith.addf %19, %21 : vector<8x128xf32>
    %c0_17 = arith.constant 0 : index
    %c0_18 = arith.constant 0 : index
    %23 = vector.load %arg9[%c0_17, %c0_18] : memref<8x128xf32, #tpu.memory_space<vmem>>, vector<8x128xf32>
    tpu.vector_store %arg9[%c0_17, %c0_18], %22 {strides = array<i32>} : memref<8x128xf32, #tpu.memory_space<vmem>>, vector<8x128xf32>,
    return
  }
  func.func @transform_0(%arg0: i32, %arg1: i32) -> (i32, i32) {
    %c0_i32 = arith.constant 0 : i32
    return %arg0, %arg1 : i32, i32
  }
  func.func @transform_1(%arg0: i32, %arg1: i32) -> (i32, i32) {
    %c0_i32 = arith.constant 0 : i32
    %c0_i32_0 = arith.constant 0 : i32
    %c0_i32_1 = arith.constant 0 : i32
    return %c0_i32, %c0_i32_0 : i32, i32
  }
  func.func @transform_2(%arg0: i32, %arg1: i32) -> (i32, i32) {
    %c0_i32 = arith.constant 0 : i32
    %c0_i32_0 = arith.constant 0 : i32
    %c0_i32_1 = arith.constant 0 : i32
    return %c0_i32, %c0_i32_0 : i32, i32
  }
  func.func @transform_3(%arg0: i32, %arg1: i32) -> (i32, i32) {
    %c0_i32 = arith.constant 0 : i32
    %c0_i32_0 = arith.constant 0 : i32
    %c0_i32_1 = arith.constant 0 : i32
    return %c0_i32, %c0_i32_0 : i32, i32
  }
  func.func @transform_4(%arg0: i32, %arg1: i32) -> (i32, i32) {
    %c0_i32 = arith.constant 0 : i32
    %c0_i32_0 = arith.constant 0 : i32
    %c0_i32_1 = arith.constant 0 : i32
    return %c0_i32, %c0_i32_0 : i32, i32
  }
  func.func @transform_5(%arg0: i32, %arg1: i32) -> (i32, i32) {
    %c0_i32 = arith.constant 0 : i32
    %c0_i32_0 = arith.constant 0 : i32
    %c0_i32_1 = arith.constant 0 : i32
    return %c0_i32, %c0_i32_0 : i32, i32
  }
  func.func @transform_6(%arg0: i32, %arg1: i32) -> (i32, i32) {
    %c0_i32 = arith.constant 0 : i32
    %c0_i32_0 = arith.constant 0 : i32
    %c0_i32_1 = arith.constant 0 : i32
    return %c0_i32, %c0_i32_0 : i32, i32
  }
  func.func @transform_7(%arg0: i32, %arg1: i32) -> (i32, i32) {
    %c0_i32 = arith.constant 0 : i32
    %c0_i32_0 = arith.constant 0 : i32
    return %arg0, %c0_i32 : i32, i32
  }
}

</mosaic_0001>

<llo_original>
// kernel: tpu_custom_call.1
$region0: #{tpu_custom_call.1}
  #allocation0 [shape = 'u32[]', space=smem, size = 0x4, offset = 0x4, fixed_abs, tag = 'smem constant byte address 0x4 - core index']
  #allocation1 [shape = 'u32[144,128]{1,0:T(1,128)}', space=vmem, size = 0x12000, scoped, tag = 'internal scratch']
  %s0 = inlined_call_operand.hbm [shape: f32[8,16], index: 0, kind: input, shape index: {}]
  %s1 = inlined_call_operand.hbm [shape: bf16[16,1024], index: 1, kind: input, shape index: {}]
  %s2 = inlined_call_operand.hbm [shape: f32[1,1024], index: 2, kind: input, shape index: {}]
  %s3 = inlined_call_operand.hbm [shape: bf16[1024,512], index: 3, kind: input, shape index: {}]
  %s4 = inlined_call_operand.vmem [shape: f32[1,512], index: 4, kind: input, shape index: {}]
  %s5 = inlined_call_operand.hbm [shape: bf16[512,128], index: 5, kind: input, shape index: {}]
  %s6 = inlined_call_operand.vmem [shape: f32[1,128], index: 6, kind: input, shape index: {}]
  %s7 = inlined_call_operand.hbm [shape: f32[8,128], index: 7, kind: output, shape index: {}]
  %s8 = sld [smem:[#allocation0]]
  $region58: #{tpu_custom_call.1} parent=0
    _
  %s10 = ssub.s32 1, %s8
  %s11 = scalar_select 0, %s10, %s8
  $region1: #{tpu_custom_call.1} parent=0
    #allocation2 [shape = 'u8[4096]{0}', space=vmem, size = 0x1000, scoped, tag = 'input window, operand 0, single buffered']
    #allocation3 [shape = 's32[1]{0}', space=sflag, size = 0x4, scoped, tag = 'scoped memory for tpu_custom_call.1']
    #allocation4 [shape = 's32[1]{0}', space=sflag, size = 0x4, scoped, tag = 'scoped memory for tpu_custom_call.1']
    #allocation5 [shape = 'u8[32768]{0}', space=vmem, size = 0x8000, scoped, tag = 'input window, operand 1, single buffered']
    #allocation6 [shape = 's32[1]{0}', space=sflag, size = 0x4, scoped, tag = 'scoped memory for tpu_custom_call.1']
    #allocation7 [shape = 'u8[4096]{0}', space=vmem, size = 0x1000, scoped, tag = 'input window, operand 2, single buffered']
    #allocation8 [shape = 'u8[1048576]{0}', space=vmem, size = 0x100000, scoped, tag = 'input window, operand 3, single buffered']
    #allocation9 [shape = 's32[1]{0}', space=sflag, size = 0x4, scoped, tag = 'scoped memory for tpu_custom_call.1']
    #allocation10 [shape = 'u8[131072]{0}', space=vmem, size = 0x20000, scoped, tag = 'input window, operand 5, single buffered']
    #allocation11 [shape = 'u8[4096]{0}', space=vmem, size = 0x1000, scoped, tag = 'output window, operand 0, single buffered']
    %12 = vsyncpa [#allocation3], 0
    %13 = vsyncpa [#allocation6], 0
    %14 = vsyncpa [#allocation9], 0
    %15 = vsyncpa [#allocation4], 0
    // Predicated region
    $region2: #{tpu_custom_call.1} parent=1 // pred_check
      _
    $region3: #{tpu_custom_call.1} parent=1 // pred_check_branch
      %17 = sbr.rel (0) target = $region5
    $region4: #{tpu_custom_call.1} parent=1 // pred_region
      %s19 = ssub.s32 128, 128
      %20 = vsyncadd [#allocation3], %s19
      %s22 = sshll.u32 [#allocation2], 4
      %s23 = int_to_ptr.vmem [resolvable:$true] %s22
      %25 = dma.hbm_to_vmem [thread:$0]  %s0, 128, %s23, [#allocation3]
    $region5: #{tpu_custom_call.1} parent=1 // pred_fallthru
      _
    // Predicated region
    $region6: #{tpu_custom_call.1} parent=1 // pred_check
      _
    $region7: #{tpu_custom_call.1} parent=1 // pred_check_branch
      %27 = sbr.rel (0) target = $region9
    $region8: #{tpu_custom_call.1} parent=1 // pred_region
      %s29 = ssub.s32 1024, 1024
      %30 = vsyncadd [#allocation6], %s29
      %s31 = sshll.u32 [#allocation5], 4
      %s32 = int_to_ptr.vmem [resolvable:$true] %s31
      %37 = dma.hbm_to_vmem [thread:$0]  %s1, 1024, %s32, [#allocation6], 512, 512, 32
    $region9: #{tpu_custom_call.1} parent=1 // pred_fallthru
      _
    // Predicated region
    $region10: #{tpu_custom_call.1} parent=1 // pred_check
      _
    $region11: #{tpu_custom_call.1} parent=1 // pred_check_branch
      %39 = sbr.rel (0) target = $region13
    $region12: #{tpu_custom_call.1} parent=1 // pred_region
      %s41 = ssub.s32 128, 128
      %42 = vsyncadd [#allocation6], %s41
      %s44 = sshll.u32 [#allocation7], 4
      %s45 = int_to_ptr.vmem [resolvable:$true] %s44
      %47 = dma.hbm_to_vmem [thread:$0]  %s2, 128, %s45, [#allocation6]
    $region13: #{tpu_custom_call.1} parent=1 // pred_fallthru
      _
    // Predicated region
    $region14: #{tpu_custom_call.1} parent=1 // pred_check
      _
    $region15: #{tpu_custom_call.1} parent=1 // pred_check_branch
      %49 = sbr.rel (0) target = $region17
    $region16: #{tpu_custom_call.1} parent=1 // pred_region
      %s51 = ssub.s32 32768, 32768
      %52 = vsyncadd [#allocation9], %s51
      %s53 = sshll.u32 [#allocation8], 4
      %s54 = int_to_ptr.vmem [resolvable:$true] %s53
      %59 = dma.hbm_to_vmem [thread:$0]  %s3, 32768, %s54, [#allocation9], 256, 256, 16
    $region17: #{tpu_custom_call.1} parent=1 // pred_fallthru
      _
    // Predicated region
    $region18: #{tpu_custom_call.1} parent=1 // pred_check
      _
    $region19: #{tpu_custom_call.1} parent=1 // pred_check_branch
      %61 = sbr.rel (0) target = $region21
    $region20: #{tpu_custom_call.1} parent=1 // pred_region
      _
    $region21: #{tpu_custom_call.1} parent=1 // pred_fallthru
      _
    // Predicated region
    $region22: #{tpu_custom_call.1} parent=1 // pred_check
      _
    $region23: #{tpu_custom_call.1} parent=1 // pred_check_branch
      %63 = sbr.rel (0) target = $region25
    $region24: #{tpu_custom_call.1} parent=1 // pred_region
      %s65 = ssub.s32 4096, 4096
      %66 = vsyncadd [#allocation9], %s65
      %s67 = sshll.u32 [#allocation10], 4
      %s68 = int_to_ptr.vmem [resolvable:$true] %s67
      %73 = dma.hbm_to_vmem [thread:$0]  %s5, 4096, %s68, [#allocation9], 64, 64, 4
    $region25: #{tpu_custom_call.1} parent=1 // pred_fallthru
      _
    // Predicated region
    $region26: #{tpu_custom_call.1} parent=1 // pred_check
      _
    $region27: #{tpu_custom_call.1} parent=1 // pred_check_branch
      %75 = sbr.rel (0) target = $region29
    $region28: #{tpu_custom_call.1} parent=1 // pred_region
      _
    $region29: #{tpu_custom_call.1} parent=1 // pred_fallthru
      _
    // Predicated region
    $region30: #{tpu_custom_call.1} parent=1 // pred_check
      _
    $region31: #{tpu_custom_call.1} parent=1 // pred_check_branch
      %77 = sbr.rel (0) target = $region33
    $region32: #{tpu_custom_call.1} parent=1 // pred_region
      %78 = dma.done [#allocation3], 128
    $region33: #{tpu_custom_call.1} parent=1 // pred_fallthru
      _
    // Predicated region
    $region34: #{tpu_custom_call.1} parent=1 // pred_check
      _
    $region35: #{tpu_custom_call.1} parent=1 // pred_check_branch
      %80 = sbr.rel (0) target = $region37
    $region36: #{tpu_custom_call.1} parent=1 // pred_region
      %81 = dma.done [#allocation6], 1024
    $region37: #{tpu_custom_call.1} parent=1 // pred_fallthru
      _
    // Predicated region
    $region38: #{tpu_custom_call.1} parent=1 // pred_check
      _
    $region39: #{tpu_custom_call.1} parent=1 // pred_check_branch
      %83 = sbr.rel (0) target = $region41
    $region40: #{tpu_custom_call.1} parent=1 // pred_region
      %84 = dma.done [#allocation6], 128
    $region41: #{tpu_custom_call.1} parent=1 // pred_fallthru
      _
    // Predicated region
    $region42: #{tpu_custom_call.1} parent=1 // pred_check
      _
    $region43: #{tpu_custom_call.1} parent=1 // pred_check_branch
      %86 = sbr.rel (0) target = $region45
    $region44: #{tpu_custom_call.1} parent=1 // pred_region
      %87 = dma.done [#allocation9], 32768
    $region45: #{tpu_custom_call.1} parent=1 // pred_fallthru
      _
    // Predicated region
    $region46: #{tpu_custom_call.1} parent=1 // pred_check
      _
    $region47: #{tpu_custom_call.1} parent=1 // pred_check_branch
      %89 = sbr.rel (0) target = $region49
    $region48: #{tpu_custom_call.1} parent=1 // pred_region
      %90 = dma.done [#allocation9], 4096
    $region49: #{tpu_custom_call.1} parent=1 // pred_fallthru
      _
    %v92 = vld [vmem:[#allocation2] sm:$0xff]
    %v93 = vpack.c.bf16 %v92, %v92
    %v94 = vld [vmem:[#allocation5] sm:$0xff]
    %v95 = vld [vmem:[#allocation5 + $0x8] sm:$0xff]
    %v96 = vld [vmem:[#allocation5 + $0x10] sm:$0xff]
    %v97 = vld [vmem:[#allocation5 + $0x18] sm:$0xff]
    %v98 = vld [vmem:[#allocation5 + $0x20] sm:$0xff]
    %v99 = vld [vmem:[#allocation5 + $0x28] sm:$0xff]
    %v100 = vld [vmem:[#allocation5 + $0x30] sm:$0xff]
    %v101 = vld [vmem:[#allocation5 + $0x38] sm:$0xff]
    %v102 = vld [vmem:[#allocation7] sm:$0xff]
    %v104 = vlaneseq
    %v105 = vshrl.u32 %v104, 7
    %v106 = vsub.s32 0, %v105
    %v107 = vrot.slane %v102, %v106
    %v108 = vlaneseq
    %v109 = vshrl.u32 %v108, 7
    %v110 = vsub.s32 1, %v109
    %v111 = vrot.slane %v102, %v110
    %v112 = vlaneseq
    %v113 = vshrl.u32 %v112, 7
    %v114 = vsub.s32 2, %v113
    %v115 = vrot.slane %v102, %v114
    %v116 = vlaneseq
    %v117 = vshrl.u32 %v116, 7
    %v118 = vsub.s32 3, %v117
    %v119 = vrot.slane %v102, %v118
    %v120 = vlaneseq
    %v121 = vshrl.u32 %v120, 7
    %v122 = vsub.s32 4, %v121
    %v123 = vrot.slane %v102, %v122
    %v124 = vlaneseq
    %v125 = vshrl.u32 %v124, 7
    %v126 = vsub.s32 5, %v125
    %v127 = vrot.slane %v102, %v126
    %v128 = vlaneseq
    %v129 = vshrl.u32 %v128, 7
    %v130 = vsub.s32 6, %v129
    %v131 = vrot.slane %v102, %v130
    %v132 = vlaneseq
    %v133 = vshrl.u32 %v132, 7
    %v134 = vsub.s32 7, %v133
    %v135 = vrot.slane %v102, %v134
    %v152 = vunpack.c.l.b16 %v94
    %v153 = vunpack.c.h.b16 %v94
    %v154 = vunpack.c.l.b16 %v95
    %v155 = vunpack.c.h.b16 %v95
    %v156 = vunpack.c.l.b16 %v96
    %v157 = vunpack.c.h.b16 %v96
    %v158 = vunpack.c.l.b16 %v97
    %v159 = vunpack.c.h.b16 %v97
    %v160 = vunpack.c.l.b16 %v98
    %v161 = vunpack.c.h.b16 %v98
    %v162 = vunpack.c.l.b16 %v99
    %v163 = vunpack.c.h.b16 %v99
    %v164 = vunpack.c.l.b16 %v100
    %v165 = vunpack.c.h.b16 %v100
    %v166 = vunpack.c.l.b16 %v101
    %v167 = vunpack.c.h.b16 %v101
    %v168 = vpack.c.b16 %v160, %v152
    %v169 = vpack.c.b16 %v161, %v153
    %v170 = vpack.c.b16 %v162, %v154
    %v171 = vpack.c.b16 %v163, %v155
    %v172 = vpack.c.b16 %v164, %v156
    %v173 = vpack.c.b16 %v165, %v157
    %v174 = vpack.c.b16 %v166, %v158
    %v175 = vpack.c.b16 %v167, %v159
    %vm184 = vcmask 130048
    %v186 = vsel %vm184, %v93, 0
    %188 = vmatprep.subr.bf16.mxu0 %v169
    %189 = vmatpush1.bf16.msra.mxu0 %v168
    %190 = vmatprep.subr.bf16.mxu0 0
    %191 = vmatpush1.bf16.msra.mxu0 0
    %192 = vmatprep.subr.bf16.mxu0 0
    %193 = vmatpush1.bf16.msra.mxu0 0
    %194 = vmatprep.subr.bf16.mxu0 0
    %195 = vmatpush1.bf16.msra.mxu0 0
    %196 = vmatprep.subr.bf16.mxu0 0
    %197 = vmatpush1.bf16.msra.mxu0 0
    %198 = vmatprep.subr.bf16.mxu0 0
    %199 = vmatpush1.bf16.msra.mxu0 0
    %200 = vmatprep.subr.bf16.mxu0 0
    %201 = vmatpush1.bf16.msra.mxu0 0
    %202 = vmatprep.subr.bf16.mxu0 0
    %203 = vmatpush1.bf16.msra.mxu0 0
    %204 = vmatprep.subr.bf16.mxu0 0
    %205 = vmatpush1.bf16.msra.mxu0 0
    %206 = vmatprep.subr.bf16.mxu0 0
    %207 = vmatpush1.bf16.msra.mxu0 0
    %208 = vmatprep.subr.bf16.mxu0 0
    %209 = vmatpush1.bf16.msra.mxu0 0
    %210 = vmatprep.subr.bf16.mxu0 0
    %211 = vmatpush1.bf16.msra.mxu0 0
    %212 = vmatprep.subr.bf16.mxu0 0
    %213 = vmatpush1.bf16.msra.mxu0 0
    %214 = vmatprep.subr.bf16.mxu0 0
    %215 = vmatpush1.bf16.msra.mxu0 0
    %216 = vmatprep.subr.bf16.mxu0 0
    %217 = vmatpush1.bf16.msra.mxu0 0
    %218 = vmatprep.subr.bf16.mxu0 0
    %219 = vmatpush1.bf16.msra.mxu0 0
    %220 = vmatprep.mubr.bf16.mxu0 0
    %221 = vmatmul.mubr.bf16.gmra.mrb[0].mxu0 %v186
    %v222 = vpop.f32.mrb[0].mxu0
    %v223 = vadd.f32 %v107, %v222
    %v224 = vpop.f32.mrb[0].mxu0
    %v225 = vadd.f32 %v111, %v224
    %v226 = vpop.f32.mrb[0].mxu0
    %v227 = vpop.f32.mrb[0].mxu0
    %228 = vdwg.mxu0
    %229 = vmatprep.subr.bf16.mxu0 %v171
    %230 = vmatpush1.bf16.msra.mxu0 %v170
    %231 = vmatprep.subr.bf16.mxu0 0
    %232 = vmatpush1.bf16.msra.mxu0 0
    %233 = vmatprep.subr.bf16.mxu0 0
    %234 = vmatpush1.bf16.msra.mxu0 0
    %235 = vmatprep.subr.bf16.mxu0 0
    %236 = vmatpush1.bf16.msra.mxu0 0
    %237 = vmatprep.subr.bf16.mxu0 0
    %238 = vmatpush1.bf16.msra.mxu0 0
    %239 = vmatprep.subr.bf16.mxu0 0
    %240 = vmatpush1.bf16.msra.mxu0 0
    %241 = vmatprep.subr.bf16.mxu0 0
    %242 = vmatpush1.bf16.msra.mxu0 0
    %243 = vmatprep.subr.bf16.mxu0 0
    %244 = vmatpush1.bf16.msra.mxu0 0
    %245 = vmatprep.subr.bf16.mxu0 0
    %246 = vmatpush1.bf16.msra.mxu0 0
    %247 = vmatprep.subr.bf16.mxu0 0
    %248 = vmatpush1.bf16.msra.mxu0 0
    %249 = vmatprep.subr.bf16.mxu0 0
    %250 = vmatpush1.bf16.msra.mxu0 0
    %251 = vmatprep.subr.bf16.mxu0 0
    %252 = vmatpush1.bf16.msra.mxu0 0
    %253 = vmatprep.subr.bf16.mxu0 0
    %254 = vmatpush1.bf16.msra.mxu0 0
    %255 = vmatprep.subr.bf16.mxu0 0
    %256 = vmatpush1.bf16.msra.mxu0 0
    %257 = vmatprep.subr.bf16.mxu0 0
    %258 = vmatpush1.bf16.msra.mxu0 0
    %259 = vmatprep.subr.bf16.mxu0 0
    %260 = vmatpush1.bf16.msra.mxu0 0
    %261 = vmatprep.mubr.bf16.mxu0 0
    %262 = vmatmul.mubr.bf16.gmra.mrb[0].mxu0 %v186
    %v263 = vpop.f32.mrb[0].mxu0
    %v264 = vadd.f32 %v115, %v263
    %v265 = vpop.f32.mrb[0].mxu0
    %v266 = vadd.f32 %v119, %v265
    %v267 = vpop.f32.mrb[0].mxu0
    %v268 = vpop.f32.mrb[0].mxu0
    %269 = vdwg.mxu0
    %270 = vmatprep.subr.bf16.mxu0 %v173
    %271 = vmatpush1.bf16.msra.mxu0 %v172
    %272 = vmatprep.subr.bf16.mxu0 0
    %273 = vmatpush1.bf16.msra.mxu0 0
    %274 = vmatprep.subr.bf16.mxu0 0
    %275 = vmatpush1.bf16.msra.mxu0 0
    %276 = vmatprep.subr.bf16.mxu0 0
    %277 = vmatpush1.bf16.msra.mxu0 0
    %278 = vmatprep.subr.bf16.mxu0 0
    %279 = vmatpush1.bf16.msra.mxu0 0
    %280 = vmatprep.subr.bf16.mxu0 0
    %281 = vmatpush1.bf16.msra.mxu0 0
    %282 = vmatprep.subr.bf16.mxu0 0
    %283 = vmatpush1.bf16.msra.mxu0 0
    %284 = vmatprep.subr.bf16.mxu0 0
    %285 = vmatpush1.bf16.msra.mxu0 0
    %286 = vmatprep.subr.bf16.mxu0 0
    %287 = vmatpush1.bf16.msra.mxu0 0
    %288 = vmatprep.subr.bf16.mxu0 0
    %289 = vmatpush1.bf16.msra.mxu0 0
    %290 = vmatprep.subr.bf16.mxu0 0
    %291 = vmatpush1.bf16.msra.mxu0 0
    %292 = vmatprep.subr.bf16.mxu0 0
    %293 = vmatpush1.bf16.msra.mxu0 0
    %294 = vmatprep.subr.bf16.mxu0 0
    %295 = vmatpush1.bf16.msra.mxu0 0
    %296 = vmatprep.subr.bf16.mxu0 0
    %297 = vmatpush1.bf16.msra.mxu0 0
    %298 = vmatprep.subr.bf16.mxu0 0
    %299 = vmatpush1.bf16.msra.mxu0 0
    %300 = vmatprep.subr.bf16.mxu0 0
    %301 = vmatpush1.bf16.msra.mxu0 0
    %302 = vmatprep.mubr.bf16.mxu0 0
    %303 = vmatmul.mubr.bf16.gmra.mrb[0].mxu0 %v186
    %v304 = vpop.f32.mrb[0].mxu0
    %v305 = vadd.f32 %v123, %v304
    %v306 = vpop.f32.mrb[0].mxu0
    %v307 = vadd.f32 %v127, %v306
    %v308 = vpop.f32.mrb[0].mxu0
    %v309 = vpop.f32.mrb[0].mxu0
    %310 = vdwg.mxu0
    %311 = vmatprep.subr.bf16.mxu0 %v175
    %312 = vmatpush1.bf16.msra.mxu0 %v174
    %313 = vmatprep.subr.bf16.mxu0 0
    %314 = vmatpush1.bf16.msra.mxu0 0
    %315 = vmatprep.subr.bf16.mxu0 0
    %316 = vmatpush1.bf16.msra.mxu0 0
    %317 = vmatprep.subr.bf16.mxu0 0
    %318 = vmatpush1.bf16.msra.mxu0 0
    %319 = vmatprep.subr.bf16.mxu0 0
    %320 = vmatpush1.bf16.msra.mxu0 0
    %321 = vmatprep.subr.bf16.mxu0 0
    %322 = vmatpush1.bf16.msra.mxu0 0
    %323 = vmatprep.subr.bf16.mxu0 0
    %324 = vmatpush1.bf16.msra.mxu0 0
    %325 = vmatprep.subr.bf16.mxu0 0
    %326 = vmatpush1.bf16.msra.mxu0 0
    %327 = vmatprep.subr.bf16.mxu0 0
    %328 = vmatpush1.bf16.msra.mxu0 0
    %329 = vmatprep.subr.bf16.mxu0 0
    %330 = vmatpush1.bf16.msra.mxu0 0
    %331 = vmatprep.subr.bf16.mxu0 0
    %332 = vmatpush1.bf16.msra.mxu0 0
    %333 = vmatprep.subr.bf16.mxu0 0
    %334 = vmatpush1.bf16.msra.mxu0 0
    %335 = vmatprep.subr.bf16.mxu0 0
    %336 = vmatpush1.bf16.msra.mxu0 0
    %337 = vmatprep.subr.bf16.mxu0 0
    %338 = vmatpush1.bf16.msra.mxu0 0
    %339 = vmatprep.subr.bf16.mxu0 0
    %340 = vmatpush1.bf16.msra.mxu0 0
    %341 = vmatprep.subr.bf16.mxu0 0
    %342 = vmatpush1.bf16.msra.mxu0 0
    %343 = vmatprep.mubr.bf16.mxu0 0
    %344 = vmatmul.mubr.bf16.gmra.mrb[0].mxu0 %v186
    %v345 = vpop.f32.mrb[0].mxu0
    %v346 = vadd.f32 %v131, %v345
    %v347 = vpop.f32.mrb[0].mxu0
    %v348 = vadd.f32 %v135, %v347
    %v349 = vpop.f32.mrb[0].mxu0
    %v350 = vpop.f32.mrb[0].mxu0
    %351 = vdwg.mxu0
    %v352 = vmax.f32 %v223, 0.0
    %v353 = vmax.f32 %v225, 0.0
    %v354 = vmax.f32 %v264, 0.0
    %v355 = vmax.f32 %v266, 0.0
    %v356 = vmax.f32 %v305, 0.0
    %v357 = vmax.f32 %v307, 0.0
    %v358 = vmax.f32 %v346, 0.0
    %v359 = vmax.f32 %v348, 0.0
    %v360 = vpack.c.bf16 %v352, %v352
    %v361 = vpack.c.bf16 %v353, %v353
    %v362 = vpack.c.bf16 %v354, %v354
    %v363 = vpack.c.bf16 %v355, %v355
    %v364 = vpack.c.bf16 %v356, %v356
    %v365 = vpack.c.bf16 %v357, %v357
    %v366 = vpack.c.bf16 %v358, %v358
    %v367 = vpack.c.bf16 %v359, %v359
    %v368 = vld [vmem:[#allocation8] sm:$0xff]
    %v369 = vld [vmem:[#allocation8 + $0x8] sm:$0xff]
    %v370 = vld [vmem:[#allocation8 + $0x10] sm:$0xff]
    %v371 = vld [vmem:[#allocation8 + $0x18] sm:$0xff]
    %v372 = vld [vmem:[#allocation8 + $0x20] sm:$0xff]
    %v373 = vld [vmem:[#allocation8 + $0x28] sm:$0xff]
    %v374 = vld [vmem:[#allocation8 + $0x30] sm:$0xff]
    %v375 = vld [vmem:[#allocation8 + $0x38] sm:$0xff]
    %v376 = vld [vmem:[#allocation8 + $0x40] sm:$0xff]
    %v377 = vld [vmem:[#allocation8 + $0x48] sm:$0xff]
    %v378 = vld [vmem:[#allocation8 + $0x50] sm:$0xff]
    %v379 = vld [vmem:[#allocation8 + $0x58] sm:$0xff]
    %v380 = vld [vmem:[#allocation8 + $0x60] sm:$0xff]
    %v381 = vld [vmem:[#allocation8 + $0x68] sm:$0xff]
    %v382 = vld [vmem:[#allocation8 + $0x70] sm:$0xff]
    %v383 = vld [vmem:[#allocation8 + $0x78] sm:$0xff]
    %v384 = vld [vmem:[#allocation8 + $0x80] sm:$0xff]
    %v385 = vld [vmem:[#allocation8 + $0x88] sm:$0xff]
    %v386 = vld [vmem:[#allocation8 + $0x90] sm:$0xff]
    %v387 = vld [vmem:[#allocation8 + $0x98] sm:$0xff]
    %v388 = vld [vmem:[#allocation8 + $0xa0] sm:$0xff]
    %v389 = vld [vmem:[#allocation8 + $0xa8] sm:$0xff]
    %v390 = vld [vmem:[#allocation8 + $0xb0] sm:$0xff]
    %v391 = vld [vmem:[#allocation8 + $0xb8] sm:$0xff]
    %v392 = vld [vmem:[#allocation8 + $0xc0] sm:$0xff]
    %v393 = vld [vmem:[#allocation8 + $0xc8] sm:$0xff]
    %v394 = vld [vmem:[#allocation8 + $0xd0] sm:$0xff]
    %v395 = vld [vmem:[#allocation8 + $0xd8] sm:$0xff]
    %v396 = vld [vmem:[#allocation8 + $0xe0] sm:$0xff]
    %v397 = vld [vmem:[#allocation8 + $0xe8] sm:$0xff]
    %v398 = vld [vmem:[#allocation8 + $0xf0] sm:$0xff]
    %v399 = vld [vmem:[#allocation8 + $0xf8] sm:$0xff]
    %v400 = vld [vmem:[#allocation8 + $0x100] sm:$0xff]
    %v401 = vld [vmem:[#allocation8 + $0x108] sm:$0xff]
    %v402 = vld [vmem:[#allocation8 + $0x110] sm:$0xff]
    %v403 = vld [vmem:[#allocation8 + $0x118] sm:$0xff]
    %v404 = vld [vmem:[#allocation8 + $0x120] sm:$0xff]
    %v405 = vld [vmem:[#allocation8 + $0x128] sm:$0xff]
    %v406 = vld [vmem:[#allocation8 + $0x130] sm:$0xff]
    %v407 = vld [vmem:[#allocation8 + $0x138] sm:$0xff]
    %v408 = vld [vmem:[#allocation8 + $0x140] sm:$0xff]
    %v409 = vld [vmem:[#allocation8 + $0x148] sm:$0xff]
    %v410 = vld [vmem:[#allocation8 + $0x150] sm:$0xff]
    %v411 = vld [vmem:[#allocation8 + $0x158] sm:$0xff]
    %v412 = vld [vmem:[#allocation8 + $0x160] sm:$0xff]
    %v413 = vld [vmem:[#allocation8 + $0x168] sm:$0xff]
    %v414 = vld [vmem:[#allocation8 + $0x170] sm:$0xff]
    %v415 = vld [vmem:[#allocation8 + $0x178] sm:$0xff]
    %v416 = vld [vmem:[#allocation8 + $0x180] sm:$0xff]
    %v417 = vld [vmem:[#allocation8 + $0x188] sm:$0xff]
    %v418 = vld [vmem:[#allocation8 + $0x190] sm:$0xff]
    %v419 = vld [vmem:[#allocation8 + $0x198] sm:$0xff]
    %v420 = vld [vmem:[#allocation8 + $0x1a0] sm:$0xff]
    %v421 = vld [vmem:[#allocation8 + $0x1a8] sm:$0xff]
    %v422 = vld [vmem:[#allocation8 + $0x1b0] sm:$0xff]
    %v423 = vld [vmem:[#allocation8 + $0x1b8] sm:$0xff]
    %v424 = vld [vmem:[#allocation8 + $0x1c0] sm:$0xff]
    %v425 = vld [vmem:[#allocation8 + $0x1c8] sm:$0xff]
    %v426 = vld [vmem:[#allocation8 + $0x1d0] sm:$0xff]
    %v427 = vld [vmem:[#allocation8 + $0x1d8] sm:$0xff]
    %v428 = vld [vmem:[#allocation8 + $0x1e0] sm:$0xff]
    %v429 = vld [vmem:[#allocation8 + $0x1e8] sm:$0xff]
    %v430 = vld [vmem:[#allocation8 + $0x1f0] sm:$0xff]
    %v431 = vld [vmem:[#allocation8 + $0x1f8] sm:$0xff]
    %v432 = vld [vmem:[#allocation8 + $0x200] sm:$0xff]
    %v433 = vld [vmem:[#allocation8 + $0x208] sm:$0xff]
    %v434 = vld [vmem:[#allocation8 + $0x210] sm:$0xff]
    %v435 = vld [vmem:[#allocation8 + $0x218] sm:$0xff]
    %v436 = vld [vmem:[#allocation8 + $0x220] sm:$0xff]
    %v437 = vld [vmem:[#allocation8 + $0x228] sm:$0xff]
    %v438 = vld [vmem:[#allocation8 + $0x230] sm:$0xff]
    %v439 = vld [vmem:[#allocation8 + $0x238] sm:$0xff]
    %v440 = vld [vmem:[#allocation8 + $0x240] sm:$0xff]
    %v441 = vld [vmem:[#allocation8 + $0x248] sm:$0xff]
    %v442 = vld [vmem:[#allocation8 + $0x250] sm:$0xff]
    %v443 = vld [vmem:[#allocation8 + $0x258] sm:$0xff]
    %v444 = vld [vmem:[#allocation8 + $0x260] sm:$0xff]
    %v445 = vld [vmem:[#allocation8 + $0x268] sm:$0xff]
    %v446 = vld [vmem:[#allocation8 + $0x270] sm:$0xff]
    %v447 = vld [vmem:[#allocation8 + $0x278] sm:$0xff]
    %v448 = vld [vmem:[#allocation8 + $0x280] sm:$0xff]
    %v449 = vld [vmem:[#allocation8 + $0x288] sm:$0xff]
    %v450 = vld [vmem:[#allocation8 + $0x290] sm:$0xff]
    %v451 = vld [vmem:[#allocation8 + $0x298] sm:$0xff]
    %v452 = vld [vmem:[#allocation8 + $0x2a0] sm:$0xff]
    %v453 = vld [vmem:[#allocation8 + $0x2a8] sm:$0xff]
    %v454 = vld [vmem:[#allocation8 + $0x2b0] sm:$0xff]
    %v455 = vld [vmem:[#allocation8 + $0x2b8] sm:$0xff]
    %v456 = vld [vmem:[#allocation8 + $0x2c0] sm:$0xff]
    %v457 = vld [vmem:[#allocation8 + $0x2c8] sm:$0xff]
    %v458 = vld [vmem:[#allocation8 + $0x2d0] sm:$0xff]
    %v459 = vld [vmem:[#allocation8 + $0x2d8] sm:$0xff]
    %v460 = vld [vmem:[#allocation8 + $0x2e0] sm:$0xff]
    %v461 = vld [vmem:[#allocation8 + $0x2e8] sm:$0xff]
    %v462 = vld [vmem:[#allocation8 + $0x2f0] sm:$0xff]
    %v463 = vld [vmem:[#allocation8 + $0x2f8] sm:$0xff]
    %v464 = vld [vmem:[#allocation8 + $0x300] sm:$0xff]
    %v465 = vld [vmem:[#allocation8 + $0x308] sm:$0xff]
    %v466 = vld [vmem:[#allocation8 + $0x310] sm:$0xff]
    %v467 = vld [vmem:[#allocation8 + $0x318] sm:$0xff]
    %v468 = vld [vmem:[#allocation8 + $0x320] sm:$0xff]
    %v469 = vld [vmem:[#allocation8 + $0x328] sm:$0xff]
    %v470 = vld [vmem:[#allocation8 + $0x330] sm:$0xff]
    %v471 = vld [vmem:[#allocation8 + $0x338] sm:$0xff]
    %v472 = vld [vmem:[#allocation8 + $0x340] sm:$0xff]
    %v473 = vld [vmem:[#allocation8 + $0x348] sm:$0xff]
    %v474 = vld [vmem:[#allocation8 + $0x350] sm:$0xff]
    %v475 = vld [vmem:[#allocation8 + $0x358] sm:$0xff]
    %v476 = vld [vmem:[#allocation8 + $0x360] sm:$0xff]
    %v477 = vld [vmem:[#allocation8 + $0x368] sm:$0xff]
    %v478 = vld [vmem:[#allocation8 + $0x370] sm:$0xff]
    %v479 = vld [vmem:[#allocation8 + $0x378] sm:$0xff]
    %v480 = vld [vmem:[#allocation8 + $0x380] sm:$0xff]
    %v481 = vld [vmem:[#allocation8 + $0x388] sm:$0xff]
    %v482 = vld [vmem:[#allocation8 + $0x390] sm:$0xff]
    %v483 = vld [vmem:[#allocation8 + $0x398] sm:$0xff]
    %v484 = vld [vmem:[#allocation8 + $0x3a0] sm:$0xff]
    %v485 = vld [vmem:[#allocation8 + $0x3a8] sm:$0xff]
    %v486 = vld [vmem:[#allocation8 + $0x3b0] sm:$0xff]
    %v487 = vld [vmem:[#allocation8 + $0x3b8] sm:$0xff]
    %v488 = vld [vmem:[#allocation8 + $0x3c0] sm:$0xff]
    %v489 = vld [vmem:[#allocation8 + $0x3c8] sm:$0xff]
    %v490 = vld [vmem:[#allocation8 + $0x3d0] sm:$0xff]
    %v491 = vld [vmem:[#allocation8 + $0x3d8] sm:$0xff]
    %v492 = vld [vmem:[#allocation8 + $0x3e0] sm:$0xff]
    %v493 = vld [vmem:[#allocation8 + $0x3e8] sm:$0xff]
    %v494 = vld [vmem:[#allocation8 + $0x3f0] sm:$0xff]
    %v495 = vld [vmem:[#allocation8 + $0x3f8] sm:$0xff]
    %v496 = vld [vmem:[#allocation8 + $0x400] sm:$0xff]
    %v497 = vld [vmem:[#allocation8 + $0x408] sm:$0xff]
    %v498 = vld [vmem:[#allocation8 + $0x410] sm:$0xff]
    %v499 = vld [vmem:[#allocation8 + $0x418] sm:$0xff]
    %v500 = vld [vmem:[#allocation8 + $0x420] sm:$0xff]
    %v501 = vld [vmem:[#allocation8 + $0x428] sm:$0xff]
    %v502 = vld [vmem:[#allocation8 + $0x430] sm:$0xff]
    %v503 = vld [vmem:[#allocation8 + $0x438] sm:$0xff]
    %v504 = vld [vmem:[#allocation8 + $0x440] sm:$0xff]
    %v505 = vld [vmem:[#allocation8 + $0x448] sm:$0xff]
    %v506 = vld [vmem:[#allocation8 + $0x450] sm:$0xff]
    %v507 = vld [vmem:[#allocation8 + $0x458] sm:$0xff]
    %v508 = vld [vmem:[#allocation8 + $0x460] sm:$0xff]
    %v509 = vld [vmem:[#allocation8 + $0x468] sm:$0xff]
    %v510 = vld [vmem:[#allocation8 + $0x470] sm:$0xff]
    %v511 = vld [vmem:[#allocation8 + $0x478] sm:$0xff]
    %v512 = vld [vmem:[#allocation8 + $0x480] sm:$0xff]
    %v513 = vld [vmem:[#allocation8 + $0x488] sm:$0xff]
    %v514 = vld [vmem:[#allocation8 + $0x490] sm:$0xff]
    %v515 = vld [vmem:[#allocation8 + $0x498] sm:$0xff]
    %v516 = vld [vmem:[#allocation8 + $0x4a0] sm:$0xff]
    %v517 = vld [vmem:[#allocation8 + $0x4a8] sm:$0xff]
    %v518 = vld [vmem:[#allocation8 + $0x4b0] sm:$0xff]
    %v519 = vld [vmem:[#allocation8 + $0x4b8] sm:$0xff]
    %v520 = vld [vmem:[#allocation8 + $0x4c0] sm:$0xff]
    %v521 = vld [vmem:[#allocation8 + $0x4c8] sm:$0xff]
    %v522 = vld [vmem:[#allocation8 + $0x4d0] sm:$0xff]
    %v523 = vld [vmem:[#allocation8 + $0x4d8] sm:$0xff]
    %v524 = vld [vmem:[#allocation8 + $0x4e0] sm:$0xff]
    %v525 = vld [vmem:[#allocation8 + $0x4e8] sm:$0xff]
    %v526 = vld [vmem:[#allocation8 + $0x4f0] sm:$0xff]
    %v527 = vld [vmem:[#allocation8 + $0x4f8] sm:$0xff]
    %v528 = vld [vmem:[#allocation8 + $0x500] sm:$0xff]
    %v529 = vld [vmem:[#allocation8 + $0x508] sm:$0xff]
    %v530 = vld [vmem:[#allocation8 + $0x510] sm:$0xff]
    %v531 = vld [vmem:[#allocation8 + $0x518] sm:$0xff]
    %v532 = vld [vmem:[#allocation8 + $0x520] sm:$0xff]
    %v533 = vld [vmem:[#allocation8 + $0x528] sm:$0xff]
    %v534 = vld [vmem:[#allocation8 + $0x530] sm:$0xff]
    %v535 = vld [vmem:[#allocation8 + $0x538] sm:$0xff]
    %v536 = vld [vmem:[#allocation8 + $0x540] sm:$0xff]
    %v537 = vld [vmem:[#allocation8 + $0x548] sm:$0xff]
    %v538 = vld [vmem:[#allocation8 + $0x550] sm:$0xff]
    %v539 = vld [vmem:[#allocation8 + $0x558] sm:$0xff]
    %v540 = vld [vmem:[#allocation8 + $0x560] sm:$0xff]
    %v541 = vld [vmem:[#allocation8 + $0x568] sm:$0xff]
    %v542 = vld [vmem:[#allocation8 + $0x570] sm:$0xff]
    %v543 = vld [vmem:[#allocation8 + $0x578] sm:$0xff]
    %v544 = vld [vmem:[#allocation8 + $0x580] sm:$0xff]
    %v545 = vld [vmem:[#allocation8 + $0x588] sm:$0xff]
    %v546 = vld [vmem:[#allocation8 + $0x590] sm:$0xff]
    %v547 = vld [vmem:[#allocation8 + $0x598] sm:$0xff]
    %v548 = vld [vmem:[#allocation8 + $0x5a0] sm:$0xff]
    %v549 = vld [vmem:[#allocation8 + $0x5a8] sm:$0xff]
    %v550 = vld [vmem:[#allocation8 + $0x5b0] sm:$0xff]
    %v551 = vld [vmem:[#allocation8 + $0x5b8] sm:$0xff]
    %v552 = vld [vmem:[#allocation8 + $0x5c0] sm:$0xff]
    %v553 = vld [vmem:[#allocation8 + $0x5c8] sm:$0xff]
    %v554 = vld [vmem:[#allocation8 + $0x5d0] sm:$0xff]
    %v555 = vld [vmem:[#allocation8 + $0x5d8] sm:$0xff]
    %v556 = vld [vmem:[#allocation8 + $0x5e0] sm:$0xff]
    %v557 = vld [vmem:[#allocation8 + $0x5e8] sm:$0xff]
    %v558 = vld [vmem:[#allocation8 + $0x5f0] sm:$0xff]
    %v559 = vld [vmem:[#allocation8 + $0x5f8] sm:$0xff]
    %v560 = vld [vmem:[#allocation8 + $0x600] sm:$0xff]
    %v561 = vld [vmem:[#allocation8 + $0x608] sm:$0xff]
    %v562 = vld [vmem:[#allocation8 + $0x610] sm:$0xff]
    %v563 = vld [vmem:[#allocation8 + $0x618] sm:$0xff]
    %v564 = vld [vmem:[#allocation8 + $0x620] sm:$0xff]
    %v565 = vld [vmem:[#allocation8 + $0x628] sm:$0xff]
    %v566 = vld [vmem:[#allocation8 + $0x630] sm:$0xff]
    %v567 = vld [vmem:[#allocation8 + $0x638] sm:$0xff]
    %v568 = vld [vmem:[#allocation8 + $0x640] sm:$0xff]
    %v569 = vld [vmem:[#allocation8 + $0x648] sm:$0xff]
    %v570 = vld [vmem:[#allocation8 + $0x650] sm:$0xff]
    %v571 = vld [vmem:[#allocation8 + $0x658] sm:$0xff]
    %v572 = vld [vmem:[#allocation8 + $0x660] sm:$0xff]
    %v573 = vld [vmem:[#allocation8 + $0x668] sm:$0xff]
    %v574 = vld [vmem:[#allocation8 + $0x670] sm:$0xff]
    %v575 = vld [vmem:[#allocation8 + $0x678] sm:$0xff]
    %v576 = vld [vmem:[#allocation8 + $0x680] sm:$0xff]
    %v577 = vld [vmem:[#allocation8 + $0x688] sm:$0xff]
    %v578 = vld [vmem:[#allocation8 + $0x690] sm:$0xff]
    %v579 = vld [vmem:[#allocation8 + $0x698] sm:$0xff]
    %v580 = vld [vmem:[#allocation8 + $0x6a0] sm:$0xff]
    %v581 = vld [vmem:[#allocation8 + $0x6a8] sm:$0xff]
    %v582 = vld [vmem:[#allocation8 + $0x6b0] sm:$0xff]
    %v583 = vld [vmem:[#allocation8 + $0x6b8] sm:$0xff]
    %v584 = vld [vmem:[#allocation8 + $0x6c0] sm:$0xff]
    %v585 = vld [vmem:[#allocation8 + $0x6c8] sm:$0xff]
    %v586 = vld [vmem:[#allocation8 + $0x6d0] sm:$0xff]
    %v587 = vld [vmem:[#allocation8 + $0x6d8] sm:$0xff]
    %v588 = vld [vmem:[#allocation8 + $0x6e0] sm:$0xff]
    %v589 = vld [vmem:[#allocation8 + $0x6e8] sm:$0xff]
    %v590 = vld [vmem:[#allocation8 + $0x6f0] sm:$0xff]
    %v591 = vld [vmem:[#allocation8 + $0x6f8] sm:$0xff]
    %v592 = vld [vmem:[#allocation8 + $0x700] sm:$0xff]
    %v593 = vld [vmem:[#allocation8 + $0x708] sm:$0xff]
    %v594 = vld [vmem:[#allocation8 + $0x710] sm:$0xff]
    %v595 = vld [vmem:[#allocation8 + $0x718] sm:$0xff]
    %v596 = vld [vmem:[#allocation8 + $0x720] sm:$0xff]
    %v597 = vld [vmem:[#allocation8 + $0x728] sm:$0xff]
    %v598 = vld [vmem:[#allocation8 + $0x730] sm:$0xff]
    %v599 = vld [vmem:[#allocation8 + $0x738] sm:$0xff]
    %v600 = vld [vmem:[#allocation8 + $0x740] sm:$0xff]
    %v601 = vld [vmem:[#allocation8 + $0x748] sm:$0xff]
    %v602 = vld [vmem:[#allocation8 + $0x750] sm:$0xff]
    %v603 = vld [vmem:[#allocation8 + $0x758] sm:$0xff]
    %v604 = vld [vmem:[#allocation8 + $0x760] sm:$0xff]
    %v605 = vld [vmem:[#allocation8 + $0x768] sm:$0xff]
    %v606 = vld [vmem:[#allocation8 + $0x770] sm:$0xff]
    %v607 = vld [vmem:[#allocation8 + $0x778] sm:$0xff]
    %v608 = vld [vmem:[#allocation8 + $0x780] sm:$0xff]
    %v609 = vld [vmem:[#allocation8 + $0x788] sm:$0xff]
    %v610 = vld [vmem:[#allocation8 + $0x790] sm:$0xff]
    %v611 = vld [vmem:[#allocation8 + $0x798] sm:$0xff]
    %v612 = vld [vmem:[#allocation8 + $0x7a0] sm:$0xff]
    %v613 = vld [vmem:[#allocation8 + $0x7a8] sm:$0xff]
    %v614 = vld [vmem:[#allocation8 + $0x7b0] sm:$0xff]
    %v615 = vld [vmem:[#allocation8 + $0x7b8] sm:$0xff]
    %v616 = vld [vmem:[#allocation8 + $0x7c0] sm:$0xff]
    %v617 = vld [vmem:[#allocation8 + $0x7c8] sm:$0xff]
    %v618 = vld [vmem:[#allocation8 + $0x7d0] sm:$0xff]
    %v619 = vld [vmem:[#allocation8 + $0x7d8] sm:$0xff]
    %v620 = vld [vmem:[#allocation8 + $0x7e0] sm:$0xff]
    %v621 = vld [vmem:[#allocation8 + $0x7e8] sm:$0xff]
    %v622 = vld [vmem:[#allocation8 + $0x7f0] sm:$0xff]
    %v623 = vld [vmem:[#allocation8 + $0x7f8] sm:$0xff]
    %v624 = vld [vmem:[%s4] sm:$0xf]
    %v626 = vlaneseq
    %v627 = vshrl.u32 %v626, 7
    %v628 = vsub.s32 0, %v627
    %v629 = vrot.slane %v624, %v628
    %v630 = vlaneseq
    %v631 = vshrl.u32 %v630, 7
    %v632 = vsub.s32 1, %v631
    %v633 = vrot.slane %v624, %v632
    %v634 = vlaneseq
    %v635 = vshrl.u32 %v634, 7
    %v636 = vsub.s32 2, %v635
    %v637 = vrot.slane %v624, %v636
    %v638 = vlaneseq
    %v639 = vshrl.u32 %v638, 7
    %v640 = vsub.s32 3, %v639
    %v641 = vrot.slane %v624, %v640
    %v902 = vunpack.c.l.b16 %v368
    %v903 = vunpack.c.h.b16 %v368
    %v904 = vunpack.c.l.b16 %v369
    %v905 = vunpack.c.h.b16 %v369
    %v906 = vunpack.c.l.b16 %v370
    %v907 = vunpack.c.h.b16 %v370
    %v908 = vunpack.c.l.b16 %v371
    %v909 = vunpack.c.h.b16 %v371
    %v910 = vunpack.c.l.b16 %v372
    %v911 = vunpack.c.h.b16 %v372
    %v912 = vunpack.c.l.b16 %v373
    %v913 = vunpack.c.h.b16 %v373
    %v914 = vunpack.c.l.b16 %v374
    %v915 = vunpack.c.h.b16 %v374
    %v916 = vunpack.c.l.b16 %v375
    %v917 = vunpack.c.h.b16 %v375
    %v918 = vunpack.c.l.b16 %v376
    %v919 = vunpack.c.h.b16 %v376
    %v920 = vunpack.c.l.b16 %v377
    %v921 = vunpack.c.h.b16 %v377
    %v922 = vunpack.c.l.b16 %v378
    %v923 = vunpack.c.h.b16 %v378
    %v924 = vunpack.c.l.b16 %v379
    %v925 = vunpack.c.h.b16 %v379
    %v926 = vunpack.c.l.b16 %v380
    %v927 = vunpack.c.h.b16 %v380
    %v928 = vunpack.c.l.b16 %v381
    %v929 = vunpack.c.h.b16 %v381
    %v930 = vunpack.c.l.b16 %v382
    %v931 = vunpack.c.h.b16 %v382
    %v932 = vunpack.c.l.b16 %v383
    %v933 = vunpack.c.h.b16 %v383
    %v934 = vunpack.c.l.b16 %v384
    %v935 = vunpack.c.h.b16 %v384
    %v936 = vunpack.c.l.b16 %v385
    %v937 = vunpack.c.h.b16 %v385
    %v938 = vunpack.c.l.b16 %v386
    %v939 = vunpack.c.h.b16 %v386
    %v940 = vunpack.c.l.b16 %v387
    %v941 = vunpack.c.h.b16 %v387
    %v942 = vunpack.c.l.b16 %v388
    %v943 = vunpack.c.h.b16 %v388
    %v944 = vunpack.c.l.b16 %v389
    %v945 = vunpack.c.h.b16 %v389
    %v946 = vunpack.c.l.b16 %v390
    %v947 = vunpack.c.h.b16 %v390
    %v948 = vunpack.c.l.b16 %v391
    %v949 = vunpack.c.h.b16 %v391
    %v950 = vunpack.c.l.b16 %v392
    %v951 = vunpack.c.h.b16 %v392
    %v952 = vunpack.c.l.b16 %v393
    %v953 = vunpack.c.h.b16 %v393
    %v954 = vunpack.c.l.b16 %v394
    %v955 = vunpack.c.h.b16 %v394
    %v956 = vunpack.c.l.b16 %v395
    %v957 = vunpack.c.h.b16 %v395
    %v958 = vunpack.c.l.b16 %v396
    %v959 = vunpack.c.h.b16 %v396
    %v960 = vunpack.c.l.b16 %v397
    %v961 = vunpack.c.h.b16 %v397
    %v962 = vunpack.c.l.b16 %v398
    %v963 = vunpack.c.h.b16 %v398
    %v964 = vunpack.c.l.b16 %v399
    %v965 = vunpack.c.h.b16 %v399
    %v966 = vunpack.c.l.b16 %v400
    %v967 = vunpack.c.h.b16 %v400
    %v968 = vunpack.c.l.b16 %v401
    %v969 = vunpack.c.h.b16 %v401
    %v970 = vunpack.c.l.b16 %v402
    %v971 = vunpack.c.h.b16 %v402
    %v972 = vunpack.c.l.b16 %v403
    %v973 = vunpack.c.h.b16 %v403
    %v974 = vunpack.c.l.b16 %v404
    %v975 = vunpack.c.h.b16 %v404
    %v976 = vunpack.c.l.b16 %v405
    %v977 = vunpack.c.h.b16 %v405
    %v978 = vunpack.c.l.b16 %v406
    %v979 = vunpack.c.h.b16 %v406
    %v980 = vunpack.c.l.b16 %v407
    %v981 = vunpack.c.h.b16 %v407
    %v982 = vunpack.c.l.b16 %v408
    %v983 = vunpack.c.h.b16 %v408
    %v984 = vunpack.c.l.b16 %v409
    %v985 = vunpack.c.h.b16 %v409
    %v986 = vunpack.c.l.b16 %v410
    %v987 = vunpack.c.h.b16 %v410
    %v988 = vunpack.c.l.b16 %v411
    %v989 = vunpack.c.h.b16 %v411
    %v990 = vunpack.c.l.b16 %v412
    %v991 = vunpack.c.h.b16 %v412
    %v992 = vunpack.c.l.b16 %v413
    %v993 = vunpack.c.h.b16 %v413
    %v994 = vunpack.c.l.b16 %v414
    %v995 = vunpack.c.h.b16 %v414
    %v996 = vunpack.c.l.b16 %v415
    %v997 = vunpack.c.h.b16 %v415
    %v998 = vunpack.c.l.b16 %v416
    %v999 = vunpack.c.h.b16 %v416
    %v1000 = vunpack.c.l.b16 %v417
    %v1001 = vunpack.c.h.b16 %v417
    %v1002 = vunpack.c.l.b16 %v418
    %v1003 = vunpack.c.h.b16 %v418
    %v1004 = vunpack.c.l.b16 %v419
    %v1005 = vunpack.c.h.b16 %v419
    %v1006 = vunpack.c.l.b16 %v420
    %v1007 = vunpack.c.h.b16 %v420
    %v1008 = vunpack.c.l.b16 %v421
    %v1009 = vunpack.c.h.b16 %v421
    %v1010 = vunpack.c.l.b16 %v422
    %v1011 = vunpack.c.h.b16 %v422
    %v1012 = vunpack.c.l.b16 %v423
    %v1013 = vunpack.c.h.b16 %v423
    %v1014 = vunpack.c.l.b16 %v424
    %v1015 = vunpack.c.h.b16 %v424
    %v1016 = vunpack.c.l.b16 %v425
    %v1017 = vunpack.c.h.b16 %v425
    %v1018 = vunpack.c.l.b16 %v426
    %v1019 = vunpack.c.h.b16 %v426
    %v1020 = vunpack.c.l.b16 %v427
    %v1021 = vunpack.c.h.b16 %v427
    %v1022 = vunpack.c.l.b16 %v428
    %v1023 = vunpack.c.h.b16 %v428
    %v1024 = vunpack.c.l.b16 %v429
    %v1025 = vunpack.c.h.b16 %v429
    %v1026 = vunpack.c.l.b16 %v430
    %v1027 = vunpack.c.h.b16 %v430
    %v1028 = vunpack.c.l.b16 %v431
    %v1029 = vunpack.c.h.b16 %v431
    %v1030 = vunpack.c.l.b16 %v432
    %v1031 = vunpack.c.h.b16 %v432
    %v1032 = vunpack.c.l.b16 %v433
    %v1033 = vunpack.c.h.b16 %v433
    %v1034 = vunpack.c.l.b16 %v434
    %v1035 = vunpack.c.h.b16 %v434
    %v1036 = vunpack.c.l.b16 %v435
    %v1037 = vunpack.c.h.b16 %v435
    %v1038 = vunpack.c.l.b16 %v436
    %v1039 = vunpack.c.h.b16 %v436
    %v1040 = vunpack.c.l.b16 %v437
    %v1041 = vunpack.c.h.b16 %v437
    %v1042 = vunpack.c.l.b16 %v438
    %v1043 = vunpack.c.h.b16 %v438
    %v1044 = vunpack.c.l.b16 %v439
    %v1045 = vunpack.c.h.b16 %v439
    %v1046 = vunpack.c.l.b16 %v440
    %v1047 = vunpack.c.h.b16 %v440
    %v1048 = vunpack.c.l.b16 %v441
    %v1049 = vunpack.c.h.b16 %v441
    %v1050 = vunpack.c.l.b16 %v442
    %v1051 = vunpack.c.h.b16 %v442
    %v1052 = vunpack.c.l.b16 %v443
    %v1053 = vunpack.c.h.b16 %v443
    %v1054 = vunpack.c.l.b16 %v444
    %v1055 = vunpack.c.h.b16 %v444
    %v1056 = vunpack.c.l.b16 %v445
    %v1057 = vunpack.c.h.b16 %v445
    %v1058 = vunpack.c.l.b16 %v446
    %v1059 = vunpack.c.h.b16 %v446
    %v1060 = vunpack.c.l.b16 %v447
    %v1061 = vunpack.c.h.b16 %v447
    %v1062 = vunpack.c.l.b16 %v448
    %v1063 = vunpack.c.h.b16 %v448
    %v1064 = vunpack.c.l.b16 %v449
    %v1065 = vunpack.c.h.b16 %v449
    %v1066 = vunpack.c.l.b16 %v450
    %v1067 = vunpack.c.h.b16 %v450
    %v1068 = vunpack.c.l.b16 %v451
    %v1069 = vunpack.c.h.b16 %v451
    %v1070 = vunpack.c.l.b16 %v452
    %v1071 = vunpack.c.h.b16 %v452
    %v1072 = vunpack.c.l.b16 %v453
    %v1073 = vunpack.c.h.b16 %v453
    %v1074 = vunpack.c.l.b16 %v454
    %v1075 = vunpack.c.h.b16 %v454
    %v1076 = vunpack.c.l.b16 %v455
    %v1077 = vunpack.c.h.b16 %v455
    %v1078 = vunpack.c.l.b16 %v456
    %v1079 = vunpack.c.h.b16 %v456
    %v1080 = vunpack.c.l.b16 %v457
    %v1081 = vunpack.c.h.b16 %v457
    %v1082 = vunpack.c.l.b16 %v458
    %v1083 = vunpack.c.h.b16 %v458
    %v1084 = vunpack.c.l.b16 %v459
    %v1085 = vunpack.c.h.b16 %v459
    %v1086 = vunpack.c.l.b16 %v460
    %v1087 = vunpack.c.h.b16 %v460
    %v1088 = vunpack.c.l.b16 %v461
    %v1089 = vunpack.c.h.b16 %v461
    %v1090 = vunpack.c.l.b16 %v462
    %v1091 = vunpack.c.h.b16 %v462
    %v1092 = vunpack.c.l.b16 %v463
    %v1093 = vunpack.c.h.b16 %v463
    %v1094 = vunpack.c.l.b16 %v464
    %v1095 = vunpack.c.h.b16 %v464
    %v1096 = vunpack.c.l.b16 %v465
    %v1097 = vunpack.c.h.b16 %v465
    %v1098 = vunpack.c.l.b16 %v466
    %v1099 = vunpack.c.h.b16 %v466
    %v1100 = vunpack.c.l.b16 %v467
    %v1101 = vunpack.c.h.b16 %v467
    %v1102 = vunpack.c.l.b16 %v468
    %v1103 = vunpack.c.h.b16 %v468
    %v1104 = vunpack.c.l.b16 %v469
    %v1105 = vunpack.c.h.b16 %v469
    %v1106 = vunpack.c.l.b16 %v470
    %v1107 = vunpack.c.h.b16 %v470
    %v1108 = vunpack.c.l.b16 %v471
    %v1109 = vunpack.c.h.b16 %v471
    %v1110 = vunpack.c.l.b16 %v472
    %v1111 = vunpack.c.h.b16 %v472
    %v1112 = vunpack.c.l.b16 %v473
    %v1113 = vunpack.c.h.b16 %v473
    %v1114 = vunpack.c.l.b16 %v474
    %v1115 = vunpack.c.h.b16 %v474
    %v1116 = vunpack.c.l.b16 %v475
    %v1117 = vunpack.c.h.b16 %v475
    %v1118 = vunpack.c.l.b16 %v476
    %v1119 = vunpack.c.h.b16 %v476
    %v1120 = vunpack.c.l.b16 %v477
    %v1121 = vunpack.c.h.b16 %v477
    %v1122 = vunpack.c.l.b16 %v478
    %v1123 = vunpack.c.h.b16 %v478
    %v1124 = vunpack.c.l.b16 %v479
    %v1125 = vunpack.c.h.b16 %v479
    %v1126 = vunpack.c.l.b16 %v480
    %v1127 = vunpack.c.h.b16 %v480
    %v1128 = vunpack.c.l.b16 %v481
    %v1129 = vunpack.c.h.b16 %v481
    %v1130 = vunpack.c.l.b16 %v482
    %v1131 = vunpack.c.h.b16 %v482
    %v1132 = vunpack.c.l.b16 %v483
    %v1133 = vunpack.c.h.b16 %v483
    %v1134 = vunpack.c.l.b16 %v484
    %v1135 = vunpack.c.h.b16 %v484
    %v1136 = vunpack.c.l.b16 %v485
    %v1137 = vunpack.c.h.b16 %v485
    %v1138 = vunpack.c.l.b16 %v486
    %v1139 = vunpack.c.h.b16 %v486
    %v1140 = vunpack.c.l.b16 %v487
    %v1141 = vunpack.c.h.b16 %v487
    %v1142 = vunpack.c.l.b16 %v488
    %v1143 = vunpack.c.h.b16 %v488
    %v1144 = vunpack.c.l.b16 %v489
    %v1145 = vunpack.c.h.b16 %v489
    %v1146 = vunpack.c.l.b16 %v490
    %v1147 = vunpack.c.h.b16 %v490
    %v1148 = vunpack.c.l.b16 %v491
    %v1149 = vunpack.c.h.b16 %v491
    %v1150 = vunpack.c.l.b16 %v492
    %v1151 = vunpack.c.h.b16 %v492
    %v1152 = vunpack.c.l.b16 %v493
    %v1153 = vunpack.c.h.b16 %v493
    %v1154 = vunpack.c.l.b16 %v494
    %v1155 = vunpack.c.h.b16 %v494
    %v1156 = vunpack.c.l.b16 %v495
    %v1157 = vunpack.c.h.b16 %v495
    %v1158 = vunpack.c.l.b16 %v496
    %v1159 = vunpack.c.h.b16 %v496
    %v1160 = vunpack.c.l.b16 %v497
    %v1161 = vunpack.c.h.b16 %v497
    %v1162 = vunpack.c.l.b16 %v498
    %v1163 = vunpack.c.h.b16 %v498
    %v1164 = vunpack.c.l.b16 %v499
    %v1165 = vunpack.c.h.b16 %v499
    %v1166 = vunpack.c.l.b16 %v500
    %v1167 = vunpack.c.h.b16 %v500
    %v1168 = vunpack.c.l.b16 %v501
    %v1169 = vunpack.c.h.b16 %v501
    %v1170 = vunpack.c.l.b16 %v502
    %v1171 = vunpack.c.h.b16 %v502
    %v1172 = vunpack.c.l.b16 %v503
    %v1173 = vunpack.c.h.b16 %v503
    %v1174 = vunpack.c.l.b16 %v504
    %v1175 = vunpack.c.h.b16 %v504
    %v1176 = vunpack.c.l.b16 %v505
    %v1177 = vunpack.c.h.b16 %v505
    %v1178 = vunpack.c.l.b16 %v506
    %v1179 = vunpack.c.h.b16 %v506
    %v1180 = vunpack.c.l.b16 %v507
    %v1181 = vunpack.c.h.b16 %v507
    %v1182 = vunpack.c.l.b16 %v508
    %v1183 = vunpack.c.h.b16 %v508
    %v1184 = vunpack.c.l.b16 %v509
    %v1185 = vunpack.c.h.b16 %v509
    %v1186 = vunpack.c.l.b16 %v510
    %v1187 = vunpack.c.h.b16 %v510
    %v1188 = vunpack.c.l.b16 %v511
    %v1189 = vunpack.c.h.b16 %v511
    %v1190 = vunpack.c.l.b16 %v512
    %v1191 = vunpack.c.h.b16 %v512
    %v1192 = vunpack.c.l.b16 %v513
    %v1193 = vunpack.c.h.b16 %v513
    %v1194 = vunpack.c.l.b16 %v514
    %v1195 = vunpack.c.h.b16 %v514
    %v1196 = vunpack.c.l.b16 %v515
    %v1197 = vunpack.c.h.b16 %v515
    %v1198 = vunpack.c.l.b16 %v516
    %v1199 = vunpack.c.h.b16 %v516
    %v1200 = vunpack.c.l.b16 %v517
    %v1201 = vunpack.c.h.b16 %v517
    %v1202 = vunpack.c.l.b16 %v518
    %v1203 = vunpack.c.h.b16 %v518
    %v1204 = vunpack.c.l.b16 %v519
    %v1205 = vunpack.c.h.b16 %v519
    %v1206 = vunpack.c.l.b16 %v520
    %v1207 = vunpack.c.h.b16 %v520
    %v1208 = vunpack.c.l.b16 %v521
    %v1209 = vunpack.c.h.b16 %v521
    %v1210 = vunpack.c.l.b16 %v522
    %v1211 = vunpack.c.h.b16 %v522
    %v1212 = vunpack.c.l.b16 %v523
    %v1213 = vunpack.c.h.b16 %v523
    %v1214 = vunpack.c.l.b16 %v524
    %v1215 = vunpack.c.h.b16 %v524
    %v1216 = vunpack.c.l.b16 %v525
    %v1217 = vunpack.c.h.b16 %v525
    %v1218 = vunpack.c.l.b16 %v526
    %v1219 = vunpack.c.h.b16 %v526
    %v1220 = vunpack.c.l.b16 %v527
    %v1221 = vunpack.c.h.b16 %v527
    %v1222 = vunpack.c.l.b16 %v528
    %v1223 = vunpack.c.h.b16 %v528
    %v1224 = vunpack.c.l.b16 %v529
    %v1225 = vunpack.c.h.b16 %v529
    %v1226 = vunpack.c.l.b16 %v530
    %v1227 = vunpack.c.h.b16 %v530
    %v1228 = vunpack.c.l.b16 %v531
    %v1229 = vunpack.c.h.b16 %v531
    %v1230 = vunpack.c.l.b16 %v532
    %v1231 = vunpack.c.h.b16 %v532
    %v1232 = vunpack.c.l.b16 %v533
    %v1233 = vunpack.c.h.b16 %v533
    %v1234 = vunpack.c.l.b16 %v534
    %v1235 = vunpack.c.h.b16 %v534
    %v1236 = vunpack.c.l.b16 %v535
    %v1237 = vunpack.c.h.b16 %v535
    %v1238 = vunpack.c.l.b16 %v536
    %v1239 = vunpack.c.h.b16 %v536
    %v1240 = vunpack.c.l.b16 %v537
    %v1241 = vunpack.c.h.b16 %v537
    %v1242 = vunpack.c.l.b16 %v538
    %v1243 = vunpack.c.h.b16 %v538
    %v1244 = vunpack.c.l.b16 %v539
    %v1245 = vunpack.c.h.b16 %v539
    %v1246 = vunpack.c.l.b16 %v540
    %v1247 = vunpack.c.h.b16 %v540
    %v1248 = vunpack.c.l.b16 %v541
    %v1249 = vunpack.c.h.b16 %v541
    %v1250 = vunpack.c.l.b16 %v542
    %v1251 = vunpack.c.h.b16 %v542
    %v1252 = vunpack.c.l.b16 %v543
    %v1253 = vunpack.c.h.b16 %v543
    %v1254 = vunpack.c.l.b16 %v544
    %v1255 = vunpack.c.h.b16 %v544
    %v1256 = vunpack.c.l.b16 %v545
    %v1257 = vunpack.c.h.b16 %v545
    %v1258 = vunpack.c.l.b16 %v546
    %v1259 = vunpack.c.h.b16 %v546
    %v1260 = vunpack.c.l.b16 %v547
    %v1261 = vunpack.c.h.b16 %v547
    %v1262 = vunpack.c.l.b16 %v548
    %v1263 = vunpack.c.h.b16 %v548
    %v1264 = vunpack.c.l.b16 %v549
    %v1265 = vunpack.c.h.b16 %v549
    %v1266 = vunpack.c.l.b16 %v550
    %v1267 = vunpack.c.h.b16 %v550
    %v1268 = vunpack.c.l.b16 %v551
    %v1269 = vunpack.c.h.b16 %v551
    %v1270 = vunpack.c.l.b16 %v552
    %v1271 = vunpack.c.h.b16 %v552
    %v1272 = vunpack.c.l.b16 %v553
    %v1273 = vunpack.c.h.b16 %v553
    %v1274 = vunpack.c.l.b16 %v554
    %v1275 = vunpack.c.h.b16 %v554
    %v1276 = vunpack.c.l.b16 %v555
    %v1277 = vunpack.c.h.b16 %v555
    %v1278 = vunpack.c.l.b16 %v556
    %v1279 = vunpack.c.h.b16 %v556
    %v1280 = vunpack.c.l.b16 %v557
    %v1281 = vunpack.c.h.b16 %v557
    %v1282 = vunpack.c.l.b16 %v558
    %v1283 = vunpack.c.h.b16 %v558
    %v1284 = vunpack.c.l.b16 %v559
    %v1285 = vunpack.c.h.b16 %v559
    %v1286 = vunpack.c.l.b16 %v560
    %v1287 = vunpack.c.h.b16 %v560
    %v1288 = vunpack.c.l.b16 %v561
    %v1289 = vunpack.c.h.b16 %v561
    %v1290 = vunpack.c.l.b16 %v562
    %v1291 = vunpack.c.h.b16 %v562
    %v1292 = vunpack.c.l.b16 %v563
    %v1293 = vunpack.c.h.b16 %v563
    %v1294 = vunpack.c.l.b16 %v564
    %v1295 = vunpack.c.h.b16 %v564
    %v1296 = vunpack.c.l.b16 %v565
    %v1297 = vunpack.c.h.b16 %v565
    %v1298 = vunpack.c.l.b16 %v566
    %v1299 = vunpack.c.h.b16 %v566
    %v1300 = vunpack.c.l.b16 %v567
    %v1301 = vunpack.c.h.b16 %v567
    %v1302 = vunpack.c.l.b16 %v568
    %v1303 = vunpack.c.h.b16 %v568
    %v1304 = vunpack.c.l.b16 %v569
    %v1305 = vunpack.c.h.b16 %v569
    %v1306 = vunpack.c.l.b16 %v570
    %v1307 = vunpack.c.h.b16 %v570
    %v1308 = vunpack.c.l.b16 %v571
    %v1309 = vunpack.c.h.b16 %v571
    %v1310 = vunpack.c.l.b16 %v572
    %v1311 = vunpack.c.h.b16 %v572
    %v1312 = vunpack.c.l.b16 %v573
    %v1313 = vunpack.c.h.b16 %v573
    %v1314 = vunpack.c.l.b16 %v574
    %v1315 = vunpack.c.h.b16 %v574
    %v1316 = vunpack.c.l.b16 %v575
    %v1317 = vunpack.c.h.b16 %v575
    %v1318 = vunpack.c.l.b16 %v576
    %v1319 = vunpack.c.h.b16 %v576
    %v1320 = vunpack.c.l.b16 %v577
    %v1321 = vunpack.c.h.b16 %v577
    %v1322 = vunpack.c.l.b16 %v578
    %v1323 = vunpack.c.h.b16 %v578
    %v1324 = vunpack.c.l.b16 %v579
    %v1325 = vunpack.c.h.b16 %v579
    %v1326 = vunpack.c.l.b16 %v580
    %v1327 = vunpack.c.h.b16 %v580
    %v1328 = vunpack.c.l.b16 %v581
    %v1329 = vunpack.c.h.b16 %v581
    %v1330 = vunpack.c.l.b16 %v582
    %v1331 = vunpack.c.h.b16 %v582
    %v1332 = vunpack.c.l.b16 %v583
    %v1333 = vunpack.c.h.b16 %v583
    %v1334 = vunpack.c.l.b16 %v584
    %v1335 = vunpack.c.h.b16 %v584
    %v1336 = vunpack.c.l.b16 %v585
    %v1337 = vunpack.c.h.b16 %v585
    %v1338 = vunpack.c.l.b16 %v586
    %v1339 = vunpack.c.h.b16 %v586
    %v1340 = vunpack.c.l.b16 %v587
    %v1341 = vunpack.c.h.b16 %v587
    %v1342 = vunpack.c.l.b16 %v588
    %v1343 = vunpack.c.h.b16 %v588
    %v1344 = vunpack.c.l.b16 %v589
    %v1345 = vunpack.c.h.b16 %v589
    %v1346 = vunpack.c.l.b16 %v590
    %v1347 = vunpack.c.h.b16 %v590
    %v1348 = vunpack.c.l.b16 %v591
    %v1349 = vunpack.c.h.b16 %v591
    %v1350 = vunpack.c.l.b16 %v592
    %v1351 = vunpack.c.h.b16 %v592
    %v1352 = vunpack.c.l.b16 %v593
    %v1353 = vunpack.c.h.b16 %v593
    %v1354 = vunpack.c.l.b16 %v594
    %v1355 = vunpack.c.h.b16 %v594
    %v1356 = vunpack.c.l.b16 %v595
    %v1357 = vunpack.c.h.b16 %v595
    %v1358 = vunpack.c.l.b16 %v596
    %v1359 = vunpack.c.h.b16 %v596
    %v1360 = vunpack.c.l.b16 %v597
    %v1361 = vunpack.c.h.b16 %v597
    %v1362 = vunpack.c.l.b16 %v598
    %v1363 = vunpack.c.h.b16 %v598
    %v1364 = vunpack.c.l.b16 %v599
    %v1365 = vunpack.c.h.b16 %v599
    %v1366 = vunpack.c.l.b16 %v600
    %v1367 = vunpack.c.h.b16 %v600
    %v1368 = vunpack.c.l.b16 %v601
    %v1369 = vunpack.c.h.b16 %v601
    %v1370 = vunpack.c.l.b16 %v602
    %v1371 = vunpack.c.h.b16 %v602
    %v1372 = vunpack.c.l.b16 %v603
    %v1373 = vunpack.c.h.b16 %v603
    %v1374 = vunpack.c.l.b16 %v604
    %v1375 = vunpack.c.h.b16 %v604
    %v1376 = vunpack.c.l.b16 %v605
    %v1377 = vunpack.c.h.b16 %v605
    %v1378 = vunpack.c.l.b16 %v606
    %v1379 = vunpack.c.h.b16 %v606
    %v1380 = vunpack.c.l.b16 %v607
    %v1381 = vunpack.c.h.b16 %v607
    %v1382 = vunpack.c.l.b16 %v608
    %v1383 = vunpack.c.h.b16 %v608
    %v1384 = vunpack.c.l.b16 %v609
    %v1385 = vunpack.c.h.b16 %v609
    %v1386 = vunpack.c.l.b16 %v610
    %v1387 = vunpack.c.h.b16 %v610
    %v1388 = vunpack.c.l.b16 %v611
    %v1389 = vunpack.c.h.b16 %v611
    %v1390 = vunpack.c.l.b16 %v612
    %v1391 = vunpack.c.h.b16 %v612
    %v1392 = vunpack.c.l.b16 %v613
    %v1393 = vunpack.c.h.b16 %v613
    %v1394 = vunpack.c.l.b16 %v614
    %v1395 = vunpack.c.h.b16 %v614
    %v1396 = vunpack.c.l.b16 %v615
    %v1397 = vunpack.c.h.b16 %v615
    %v1398 = vunpack.c.l.b16 %v616
    %v1399 = vunpack.c.h.b16 %v616
    %v1400 = vunpack.c.l.b16 %v617
    %v1401 = vunpack.c.h.b16 %v617
    %v1402 = vunpack.c.l.b16 %v618
    %v1403 = vunpack.c.h.b16 %v618
    %v1404 = vunpack.c.l.b16 %v619
    %v1405 = vunpack.c.h.b16 %v619
    %v1406 = vunpack.c.l.b16 %v620
    %v1407 = vunpack.c.h.b16 %v620
    %v1408 = vunpack.c.l.b16 %v621
    %v1409 = vunpack.c.h.b16 %v621
    %v1410 = vunpack.c.l.b16 %v622
    %v1411 = vunpack.c.h.b16 %v622
    %v1412 = vunpack.c.l.b16 %v623
    %v1413 = vunpack.c.h.b16 %v623
    %v1414 = vpack.c.b16 %v906, %v902
    %v1415 = vpack.c.b16 %v907, %v903
    %v1416 = vpack.c.b16 %v908, %v904
    %v1417 = vpack.c.b16 %v909, %v905
    %v1418 = vpack.c.b16 %v914, %v910
    %v1419 = vpack.c.b16 %v915, %v911
    %v1420 = vpack.c.b16 %v916, %v912
    %v1421 = vpack.c.b16 %v917, %v913
    %v1422 = vpack.c.b16 %v922, %v918
    %v1423 = vpack.c.b16 %v923, %v919
    %v1424 = vpack.c.b16 %v924, %v920
    %v1425 = vpack.c.b16 %v925, %v921
    %v1426 = vpack.c.b16 %v930, %v926
    %v1427 = vpack.c.b16 %v931, %v927
    %v1428 = vpack.c.b16 %v932, %v928
    %v1429 = vpack.c.b16 %v933, %v929
    %v1430 = vpack.c.b16 %v938, %v934
    %v1431 = vpack.c.b16 %v939, %v935
    %v1432 = vpack.c.b16 %v940, %v936
    %v1433 = vpack.c.b16 %v941, %v937
    %v1434 = vpack.c.b16 %v946, %v942
    %v1435 = vpack.c.b16 %v947, %v943
    %v1436 = vpack.c.b16 %v948, %v944
    %v1437 = vpack.c.b16 %v949, %v945
    %v1438 = vpack.c.b16 %v954, %v950
    %v1439 = vpack.c.b16 %v955, %v951
    %v1440 = vpack.c.b16 %v956, %v952
    %v1441 = vpack.c.b16 %v957, %v953
    %v1442 = vpack.c.b16 %v962, %v958
    %v1443 = vpack.c.b16 %v963, %v959
    %v1444 = vpack.c.b16 %v964, %v960
    %v1445 = vpack.c.b16 %v965, %v961
    %v1446 = vpack.c.b16 %v970, %v966
    %v1447 = vpack.c.b16 %v971, %v967
    %v1448 = vpack.c.b16 %v972, %v968
    %v1449 = vpack.c.b16 %v973, %v969
    %v1450 = vpack.c.b16 %v978, %v974
    %v1451 = vpack.c.b16 %v979, %v975
    %v1452 = vpack.c.b16 %v980, %v976
    %v1453 = vpack.c.b16 %v981, %v977
    %v1454 = vpack.c.b16 %v986, %v982
    %v1455 = vpack.c.b16 %v987, %v983
    %v1456 = vpack.c.b16 %v988, %v984
    %v1457 = vpack.c.b16 %v989, %v985
    %v1458 = vpack.c.b16 %v994, %v990
    %v1459 = vpack.c.b16 %v995, %v991
    %v1460 = vpack.c.b16 %v996, %v992
    %v1461 = vpack.c.b16 %v997, %v993
    %v1462 = vpack.c.b16 %v1002, %v998
    %v1463 = vpack.c.b16 %v1003, %v999
    %v1464 = vpack.c.b16 %v1004, %v1000
    %v1465 = vpack.c.b16 %v1005, %v1001
    %v1466 = vpack.c.b16 %v1010, %v1006
    %v1467 = vpack.c.b16 %v1011, %v1007
    %v1468 = vpack.c.b16 %v1012, %v1008
    %v1469 = vpack.c.b16 %v1013, %v1009
    %v1470 = vpack.c.b16 %v1018, %v1014
    %v1471 = vpack.c.b16 %v1019, %v1015
    %v1472 = vpack.c.b16 %v1020, %v1016
    %v1473 = vpack.c.b16 %v1021, %v1017
    %v1474 = vpack.c.b16 %v1026, %v1022
    %v1475 = vpack.c.b16 %v1027, %v1023
    %v1476 = vpack.c.b16 %v1028, %v1024
    %v1477 = vpack.c.b16 %v1029, %v1025
    %v1478 = vpack.c.b16 %v1034, %v1030
    %v1479 = vpack.c.b16 %v1035, %v1031
    %v1480 = vpack.c.b16 %v1036, %v1032
    %v1481 = vpack.c.b16 %v1037, %v1033
    %v1482 = vpack.c.b16 %v1042, %v1038
    %v1483 = vpack.c.b16 %v1043, %v1039
    %v1484 = vpack.c.b16 %v1044, %v1040
    %v1485 = vpack.c.b16 %v1045, %v1041
    %v1486 = vpack.c.b16 %v1050, %v1046
    %v1487 = vpack.c.b16 %v1051, %v1047
    %v1488 = vpack.c.b16 %v1052, %v1048
    %v1489 = vpack.c.b16 %v1053, %v1049
    %v1490 = vpack.c.b16 %v1058, %v1054
    %v1491 = vpack.c.b16 %v1059, %v1055
    %v1492 = vpack.c.b16 %v1060, %v1056
    %v1493 = vpack.c.b16 %v1061, %v1057
    %v1494 = vpack.c.b16 %v1066, %v1062
    %v1495 = vpack.c.b16 %v1067, %v1063
    %v1496 = vpack.c.b16 %v1068, %v1064
    %v1497 = vpack.c.b16 %v1069, %v1065
    %v1498 = vpack.c.b16 %v1074, %v1070
    %v1499 = vpack.c.b16 %v1075, %v1071
    %v1500 = vpack.c.b16 %v1076, %v1072
    %v1501 = vpack.c.b16 %v1077, %v1073
    %v1502 = vpack.c.b16 %v1082, %v1078
    %v1503 = vpack.c.b16 %v1083, %v1079
    %v1504 = vpack.c.b16 %v1084, %v1080
    %v1505 = vpack.c.b16 %v1085, %v1081
    %v1506 = vpack.c.b16 %v1090, %v1086
    %v1507 = vpack.c.b16 %v1091, %v1087
    %v1508 = vpack.c.b16 %v1092, %v1088
    %v1509 = vpack.c.b16 %v1093, %v1089
    %v1510 = vpack.c.b16 %v1098, %v1094
    %v1511 = vpack.c.b16 %v1099, %v1095
    %v1512 = vpack.c.b16 %v1100, %v1096
    %v1513 = vpack.c.b16 %v1101, %v1097
    %v1514 = vpack.c.b16 %v1106, %v1102
    %v1515 = vpack.c.b16 %v1107, %v1103
    %v1516 = vpack.c.b16 %v1108, %v1104
    %v1517 = vpack.c.b16 %v1109, %v1105
    %v1518 = vpack.c.b16 %v1114, %v1110
    %v1519 = vpack.c.b16 %v1115, %v1111
    %v1520 = vpack.c.b16 %v1116, %v1112
    %v1521 = vpack.c.b16 %v1117, %v1113
    %v1522 = vpack.c.b16 %v1122, %v1118
    %v1523 = vpack.c.b16 %v1123, %v1119
    %v1524 = vpack.c.b16 %v1124, %v1120
    %v1525 = vpack.c.b16 %v1125, %v1121
    %v1526 = vpack.c.b16 %v1130, %v1126
    %v1527 = vpack.c.b16 %v1131, %v1127
    %v1528 = vpack.c.b16 %v1132, %v1128
    %v1529 = vpack.c.b16 %v1133, %v1129
    %v1530 = vpack.c.b16 %v1138, %v1134
    %v1531 = vpack.c.b16 %v1139, %v1135
    %v1532 = vpack.c.b16 %v1140, %v1136
    %v1533 = vpack.c.b16 %v1141, %v1137
    %v1534 = vpack.c.b16 %v1146, %v1142
    %v1535 = vpack.c.b16 %v1147, %v1143
    %v1536 = vpack.c.b16 %v1148, %v1144
    %v1537 = vpack.c.b16 %v1149, %v1145
    %v1538 = vpack.c.b16 %v1154, %v1150
    %v1539 = vpack.c.b16 %v1155, %v1151
    %v1540 = vpack.c.b16 %v1156, %v1152
    %v1541 = vpack.c.b16 %v1157, %v1153
    %v1542 = vpack.c.b16 %v1162, %v1158
    %v1543 = vpack.c.b16 %v1163, %v1159
    %v1544 = vpack.c.b16 %v1164, %v1160
    %v1545 = vpack.c.b16 %v1165, %v1161
    %v1546 = vpack.c.b16 %v1170, %v1166
    %v1547 = vpack.c.b16 %v1171, %v1167
    %v1548 = vpack.c.b16 %v1172, %v1168
    %v1549 = vpack.c.b16 %v1173, %v1169
    %v1550 = vpack.c.b16 %v1178, %v1174
    %v1551 = vpack.c.b16 %v1179, %v1175
    %v1552 = vpack.c.b16 %v1180, %v1176
    %v1553 = vpack.c.b16 %v1181, %v1177
    %v1554 = vpack.c.b16 %v1186, %v1182
    %v1555 = vpack.c.b16 %v1187, %v1183
    %v1556 = vpack.c.b16 %v1188, %v1184
    %v1557 = vpack.c.b16 %v1189, %v1185
    %v1558 = vpack.c.b16 %v1194, %v1190
    %v1559 = vpack.c.b16 %v1195, %v1191
    %v1560 = vpack.c.b16 %v1196, %v1192
    %v1561 = vpack.c.b16 %v1197, %v1193
    %v1562 = vpack.c.b16 %v1202, %v1198
    %v1563 = vpack.c.b16 %v1203, %v1199
    %v1564 = vpack.c.b16 %v1204, %v1200
    %v1565 = vpack.c.b16 %v1205, %v1201
    %v1566 = vpack.c.b16 %v1210, %v1206
    %v1567 = vpack.c.b16 %v1211, %v1207
    %v1568 = vpack.c.b16 %v1212, %v1208
    %v1569 = vpack.c.b16 %v1213, %v1209
    %v1570 = vpack.c.b16 %v1218, %v1214
    %v1571 = vpack.c.b16 %v1219, %v1215
    %v1572 = vpack.c.b16 %v1220, %v1216
    %v1573 = vpack.c.b16 %v1221, %v1217
    %v1574 = vpack.c.b16 %v1226, %v1222
    %v1575 = vpack.c.b16 %v1227, %v1223
    %v1576 = vpack.c.b16 %v1228, %v1224
    %v1577 = vpack.c.b16 %v1229, %v1225
    %v1578 = vpack.c.b16 %v1234, %v1230
    %v1579 = vpack.c.b16 %v1235, %v1231
    %v1580 = vpack.c.b16 %v1236, %v1232
    %v1581 = vpack.c.b16 %v1237, %v1233
    %v1582 = vpack.c.b16 %v1242, %v1238
    %v1583 = vpack.c.b16 %v1243, %v1239
    %v1584 = vpack.c.b16 %v1244, %v1240
    %v1585 = vpack.c.b16 %v1245, %v1241
    %v1586 = vpack.c.b16 %v1250, %v1246
    %v1587 = vpack.c.b16 %v1251, %v1247
    %v1588 = vpack.c.b16 %v1252, %v1248
    %v1589 = vpack.c.b16 %v1253, %v1249
    %v1590 = vpack.c.b16 %v1258, %v1254
    %v1591 = vpack.c.b16 %v1259, %v1255
    %v1592 = vpack.c.b16 %v1260, %v1256
    %v1593 = vpack.c.b16 %v1261, %v1257
    %v1594 = vpack.c.b16 %v1266, %v1262
    %v1595 = vpack.c.b16 %v1267, %v1263
    %v1596 = vpack.c.b16 %v1268, %v1264
    %v1597 = vpack.c.b16 %v1269, %v1265
    %v1598 = vpack.c.b16 %v1274, %v1270
    %v1599 = vpack.c.b16 %v1275, %v1271
    %v1600 = vpack.c.b16 %v1276, %v1272
    %v1601 = vpack.c.b16 %v1277, %v1273
    %v1602 = vpack.c.b16 %v1282, %v1278
    %v1603 = vpack.c.b16 %v1283, %v1279
    %v1604 = vpack.c.b16 %v1284, %v1280
    %v1605 = vpack.c.b16 %v1285, %v1281
    %v1606 = vpack.c.b16 %v1290, %v1286
    %v1607 = vpack.c.b16 %v1291, %v1287
    %v1608 = vpack.c.b16 %v1292, %v1288
    %v1609 = vpack.c.b16 %v1293, %v1289
    %v1610 = vpack.c.b16 %v1298, %v1294
    %v1611 = vpack.c.b16 %v1299, %v1295
    %v1612 = vpack.c.b16 %v1300, %v1296
    %v1613 = vpack.c.b16 %v1301, %v1297
    %v1614 = vpack.c.b16 %v1306, %v1302
    %v1615 = vpack.c.b16 %v1307, %v1303
    %v1616 = vpack.c.b16 %v1308, %v1304
    %v1617 = vpack.c.b16 %v1309, %v1305
    %v1618 = vpack.c.b16 %v1314, %v1310
    %v1619 = vpack.c.b16 %v1315, %v1311
    %v1620 = vpack.c.b16 %v1316, %v1312
    %v1621 = vpack.c.b16 %v1317, %v1313
    %v1622 = vpack.c.b16 %v1322, %v1318
    %v1623 = vpack.c.b16 %v1323, %v1319
    %v1624 = vpack.c.b16 %v1324, %v1320
    %v1625 = vpack.c.b16 %v1325, %v1321
    %v1626 = vpack.c.b16 %v1330, %v1326
    %v1627 = vpack.c.b16 %v1331, %v1327
    %v1628 = vpack.c.b16 %v1332, %v1328
    %v1629 = vpack.c.b16 %v1333, %v1329
    %v1630 = vpack.c.b16 %v1338, %v1334
    %v1631 = vpack.c.b16 %v1339, %v1335
    %v1632 = vpack.c.b16 %v1340, %v1336
    %v1633 = vpack.c.b16 %v1341, %v1337
    %v1634 = vpack.c.b16 %v1346, %v1342
    %v1635 = vpack.c.b16 %v1347, %v1343
    %v1636 = vpack.c.b16 %v1348, %v1344
    %v1637 = vpack.c.b16 %v1349, %v1345
    %v1638 = vpack.c.b16 %v1354, %v1350
    %v1639 = vpack.c.b16 %v1355, %v1351
    %v1640 = vpack.c.b16 %v1356, %v1352
    %v1641 = vpack.c.b16 %v1357, %v1353
    %v1642 = vpack.c.b16 %v1362, %v1358
    %v1643 = vpack.c.b16 %v1363, %v1359
    %v1644 = vpack.c.b16 %v1364, %v1360
    %v1645 = vpack.c.b16 %v1365, %v1361
    %v1646 = vpack.c.b16 %v1370, %v1366
    %v1647 = vpack.c.b16 %v1371, %v1367
    %v1648 = vpack.c.b16 %v1372, %v1368
    %v1649 = vpack.c.b16 %v1373, %v1369
    %v1650 = vpack.c.b16 %v1378, %v1374
    %v1651 = vpack.c.b16 %v1379, %v1375
    %v1652 = vpack.c.b16 %v1380, %v1376
    %v1653 = vpack.c.b16 %v1381, %v1377
    %v1654 = vpack.c.b16 %v1386, %v1382
    %v1655 = vpack.c.b16 %v1387, %v1383
    %v1656 = vpack.c.b16 %v1388, %v1384
    %v1657 = vpack.c.b16 %v1389, %v1385
    %v1658 = vpack.c.b16 %v1394, %v1390
    %v1659 = vpack.c.b16 %v1395, %v1391
    %v1660 = vpack.c.b16 %v1396, %v1392
    %v1661 = vpack.c.b16 %v1397, %v1393
    %v1662 = vpack.c.b16 %v1402, %v1398
    %v1663 = vpack.c.b16 %v1403, %v1399
    %v1664 = vpack.c.b16 %v1404, %v1400
    %v1665 = vpack.c.b16 %v1405, %v1401
    %v1666 = vpack.c.b16 %v1410, %v1406
    %v1667 = vpack.c.b16 %v1411, %v1407
    %v1668 = vpack.c.b16 %v1412, %v1408
    %v1669 = vpack.c.b16 %v1413, %v1409
    %1926 = vmatprep.subr.bf16.mxu0 %v1415
    %1927 = vmatpush1.bf16.msra.mxu0 %v1414
    %1928 = vmatprep.subr.bf16.mxu0 %v1419
    %1929 = vmatpush1.bf16.msra.mxu0 %v1418
    %1930 = vmatprep.subr.bf16.mxu0 %v1423
    %1931 = vmatpush1.bf16.msra.mxu0 %v1422
    %1932 = vmatprep.subr.bf16.mxu0 %v1427
    %1933 = vmatpush1.bf16.msra.mxu0 %v1426
    %1934 = vmatprep.subr.bf16.mxu0 %v1431
    %1935 = vmatpush1.bf16.msra.mxu0 %v1430
    %1936 = vmatprep.subr.bf16.mxu0 %v1435
    %1937 = vmatpush1.bf16.msra.mxu0 %v1434
    %1938 = vmatprep.subr.bf16.mxu0 %v1439
    %1939 = vmatpush1.bf16.msra.mxu0 %v1438
    %1940 = vmatprep.subr.bf16.mxu0 %v1443
    %1941 = vmatpush1.bf16.msra.mxu0 %v1442
    %1942 = vmatprep.subr.bf16.mxu0 %v1447
    %1943 = vmatpush1.bf16.msra.mxu0 %v1446
    %1944 = vmatprep.subr.bf16.mxu0 %v1451
    %1945 = vmatpush1.bf16.msra.mxu0 %v1450
    %1946 = vmatprep.subr.bf16.mxu0 %v1455
    %1947 = vmatpush1.bf16.msra.mxu0 %v1454
    %1948 = vmatprep.subr.bf16.mxu0 %v1459
    %1949 = vmatpush1.bf16.msra.mxu0 %v1458
    %1950 = vmatprep.subr.bf16.mxu0 %v1463
    %1951 = vmatpush1.bf16.msra.mxu0 %v1462
    %1952 = vmatprep.subr.bf16.mxu0 %v1467
    %1953 = vmatpush1.bf16.msra.mxu0 %v1466
    %1954 = vmatprep.subr.bf16.mxu0 %v1471
    %1955 = vmatpush1.bf16.msra.mxu0 %v1470
    %1956 = vmatprep.subr.bf16.mxu0 %v1475
    %1957 = vmatpush1.bf16.msra.mxu0 %v1474
    %1958 = vmatprep.mubr.bf16.mxu0 %v361
    %1959 = vmatmul.mubr.bf16.gmra.mrb[0].mxu0 %v360
    %v1960 = vpop.f32.mrb[0].mxu0
    %v1961 = vadd.f32 %v629, %v1960
    %v1962 = vpop.f32.mrb[0].mxu0
    %v1963 = vadd.f32 %v633, %v1962
    %v1964 = vpop.f32.mrb[0].mxu0
    %v1965 = vpop.f32.mrb[0].mxu0
    %1966 = vdwg.mxu0
    %1967 = vmatprep.subr.bf16.mxu0 %v1479
    %1968 = vmatpush1.bf16.msra.mxu0 %v1478
    %1969 = vmatprep.subr.bf16.mxu0 %v1483
    %1970 = vmatpush1.bf16.msra.mxu0 %v1482
    %1971 = vmatprep.subr.bf16.mxu0 %v1487
    %1972 = vmatpush1.bf16.msra.mxu0 %v1486
    %1973 = vmatprep.subr.bf16.mxu0 %v1491
    %1974 = vmatpush1.bf16.msra.mxu0 %v1490
    %1975 = vmatprep.subr.bf16.mxu0 %v1495
    %1976 = vmatpush1.bf16.msra.mxu0 %v1494
    %1977 = vmatprep.subr.bf16.mxu0 %v1499
    %1978 = vmatpush1.bf16.msra.mxu0 %v1498
    %1979 = vmatprep.subr.bf16.mxu0 %v1503
    %1980 = vmatpush1.bf16.msra.mxu0 %v1502
    %1981 = vmatprep.subr.bf16.mxu0 %v1507
    %1982 = vmatpush1.bf16.msra.mxu0 %v1506
    %1983 = vmatprep.subr.bf16.mxu0 %v1511
    %1984 = vmatpush1.bf16.msra.mxu0 %v1510
    %1985 = vmatprep.subr.bf16.mxu0 %v1515
    %1986 = vmatpush1.bf16.msra.mxu0 %v1514
    %1987 = vmatprep.subr.bf16.mxu0 %v1519
    %1988 = vmatpush1.bf16.msra.mxu0 %v1518
    %1989 = vmatprep.subr.bf16.mxu0 %v1523
    %1990 = vmatpush1.bf16.msra.mxu0 %v1522
    %1991 = vmatprep.subr.bf16.mxu0 %v1527
    %1992 = vmatpush1.bf16.msra.mxu0 %v1526
    %1993 = vmatprep.subr.bf16.mxu0 %v1531
    %1994 = vmatpush1.bf16.msra.mxu0 %v1530
    %1995 = vmatprep.subr.bf16.mxu0 %v1535
    %1996 = vmatpush1.bf16.msra.mxu0 %v1534
    %1997 = vmatprep.subr.bf16.mxu0 %v1539
    %1998 = vmatpush1.bf16.msra.mxu0 %v1538
    %1999 = vmatprep.mubr.bf16.mxu0 %v363
    %2000 = vmatmul.mubr.bf16.gmra.mrb[0].mxu0 %v362
    %v2001 = vpop.f32.mrb[0].mxu0
    %v2002 = vadd.f32 %v1961, %v2001
    %v2003 = vpop.f32.mrb[0].mxu0
    %v2004 = vadd.f32 %v1963, %v2003
    %v2005 = vpop.f32.mrb[0].mxu0
    %v2006 = vpop.f32.mrb[0].mxu0
    %2007 = vdwg.mxu0
    %2008 = vmatprep.subr.bf16.mxu0 %v1543
    %2009 = vmatpush1.bf16.msra.mxu0 %v1542
    %2010 = vmatprep.subr.bf16.mxu0 %v1547
    %2011 = vmatpush1.bf16.msra.mxu0 %v1546
    %2012 = vmatprep.subr.bf16.mxu0 %v1551
    %2013 = vmatpush1.bf16.msra.mxu0 %v1550
    %2014 = vmatprep.subr.bf16.mxu0 %v1555
    %2015 = vmatpush1.bf16.msra.mxu0 %v1554
    %2016 = vmatprep.subr.bf16.mxu0 %v1559
    %2017 = vmatpush1.bf16.msra.mxu0 %v1558
    %2018 = vmatprep.subr.bf16.mxu0 %v1563
    %2019 = vmatpush1.bf16.msra.mxu0 %v1562
    %2020 = vmatprep.subr.bf16.mxu0 %v1567
    %2021 = vmatpush1.bf16.msra.mxu0 %v1566
    %2022 = vmatprep.subr.bf16.mxu0 %v1571
    %2023 = vmatpush1.bf16.msra.mxu0 %v1570
    %2024 = vmatprep.subr.bf16.mxu0 %v1575
    %2025 = vmatpush1.bf16.msra.mxu0 %v1574
    %2026 = vmatprep.subr.bf16.mxu0 %v1579
    %2027 = vmatpush1.bf16.msra.mxu0 %v1578
    %2028 = vmatprep.subr.bf16.mxu0 %v1583
    %2029 = vmatpush1.bf16.msra.mxu0 %v1582
    %2030 = vmatprep.subr.bf16.mxu0 %v1587
    %2031 = vmatpush1.bf16.msra.mxu0 %v1586
    %2032 = vmatprep.subr.bf16.mxu0 %v1591
    %2033 = vmatpush1.bf16.msra.mxu0 %v1590
    %2034 = vmatprep.subr.bf16.mxu0 %v1595
    %2035 = vmatpush1.bf16.msra.mxu0 %v1594
    %2036 = vmatprep.subr.bf16.mxu0 %v1599
    %2037 = vmatpush1.bf16.msra.mxu0 %v1598
    %2038 = vmatprep.subr.bf16.mxu0 %v1603
    %2039 = vmatpush1.bf16.msra.mxu0 %v1602
    %2040 = vmatprep.mubr.bf16.mxu0 %v365
    %2041 = vmatmul.mubr.bf16.gmra.mrb[0].mxu0 %v364
    %v2042 = vpop.f32.mrb[0].mxu0
    %v2043 = vadd.f32 %v2002, %v2042
    %v2044 = vpop.f32.mrb[0].mxu0
    %v2045 = vadd.f32 %v2004, %v2044
    %v2046 = vpop.f32.mrb[0].mxu0
    %v2047 = vpop.f32.mrb[0].mxu0
    %2048 = vdwg.mxu0
    %2049 = vmatprep.subr.bf16.mxu0 %v1607
    %2050 = vmatpush1.bf16.msra.mxu0 %v1606
    %2051 = vmatprep.subr.bf16.mxu0 %v1611
    %2052 = vmatpush1.bf16.msra.mxu0 %v1610
    %2053 = vmatprep.subr.bf16.mxu0 %v1615
    %2054 = vmatpush1.bf16.msra.mxu0 %v1614
    %2055 = vmatprep.subr.bf16.mxu0 %v1619
    %2056 = vmatpush1.bf16.msra.mxu0 %v1618
    %2057 = vmatprep.subr.bf16.mxu0 %v1623
    %2058 = vmatpush1.bf16.msra.mxu0 %v1622
    %2059 = vmatprep.subr.bf16.mxu0 %v1627
    %2060 = vmatpush1.bf16.msra.mxu0 %v1626
    %2061 = vmatprep.subr.bf16.mxu0 %v1631
    %2062 = vmatpush1.bf16.msra.mxu0 %v1630
    %2063 = vmatprep.subr.bf16.mxu0 %v1635
    %2064 = vmatpush1.bf16.msra.mxu0 %v1634
    %2065 = vmatprep.subr.bf16.mxu0 %v1639
    %2066 = vmatpush1.bf16.msra.mxu0 %v1638
    %2067 = vmatprep.subr.bf16.mxu0 %v1643
    %2068 = vmatpush1.bf16.msra.mxu0 %v1642
    %2069 = vmatprep.subr.bf16.mxu0 %v1647
    %2070 = vmatpush1.bf16.msra.mxu0 %v1646
    %2071 = vmatprep.subr.bf16.mxu0 %v1651
    %2072 = vmatpush1.bf16.msra.mxu0 %v1650
    %2073 = vmatprep.subr.bf16.mxu0 %v1655
    %2074 = vmatpush1.bf16.msra.mxu0 %v1654
    %2075 = vmatprep.subr.bf16.mxu0 %v1659
    %2076 = vmatpush1.bf16.msra.mxu0 %v1658
    %2077 = vmatprep.subr.bf16.mxu0 %v1663
    %2078 = vmatpush1.bf16.msra.mxu0 %v1662
    %2079 = vmatprep.subr.bf16.mxu0 %v1667
    %2080 = vmatpush1.bf16.msra.mxu0 %v1666
    %2081 = vmatprep.mubr.bf16.mxu0 %v367
    %2082 = vmatmul.mubr.bf16.gmra.mrb[0].mxu0 %v366
    %v2083 = vpop.f32.mrb[0].mxu0
    %v2084 = vadd.f32 %v2043, %v2083
    %v2085 = vpop.f32.mrb[0].mxu0
    %v2086 = vadd.f32 %v2045, %v2085
    %v2087 = vpop.f32.mrb[0].mxu0
    %v2088 = vpop.f32.mrb[0].mxu0
    %2089 = vdwg.mxu0
    %2090 = vmatprep.subr.bf16.mxu0 %v1417
    %2091 = vmatpush1.bf16.msra.mxu0 %v1416
    %2092 = vmatprep.subr.bf16.mxu0 %v1421
    %2093 = vmatpush1.bf16.msra.mxu0 %v1420
    %2094 = vmatprep.subr.bf16.mxu0 %v1425
    %2095 = vmatpush1.bf16.msra.mxu0 %v1424
    %2096 = vmatprep.subr.bf16.mxu0 %v1429
    %2097 = vmatpush1.bf16.msra.mxu0 %v1428
    %2098 = vmatprep.subr.bf16.mxu0 %v1433
    %2099 = vmatpush1.bf16.msra.mxu0 %v1432
    %2100 = vmatprep.subr.bf16.mxu0 %v1437
    %2101 = vmatpush1.bf16.msra.mxu0 %v1436
    %2102 = vmatprep.subr.bf16.mxu0 %v1441
    %2103 = vmatpush1.bf16.msra.mxu0 %v1440
    %2104 = vmatprep.subr.bf16.mxu0 %v1445
    %2105 = vmatpush1.bf16.msra.mxu0 %v1444
    %2106 = vmatprep.subr.bf16.mxu0 %v1449
    %2107 = vmatpush1.bf16.msra.mxu0 %v1448
    %2108 = vmatprep.subr.bf16.mxu0 %v1453
    %2109 = vmatpush1.bf16.msra.mxu0 %v1452
    %2110 = vmatprep.subr.bf16.mxu0 %v1457
    %2111 = vmatpush1.bf16.msra.mxu0 %v1456
    %2112 = vmatprep.subr.bf16.mxu0 %v1461
    %2113 = vmatpush1.bf16.msra.mxu0 %v1460
    %2114 = vmatprep.subr.bf16.mxu0 %v1465
    %2115 = vmatpush1.bf16.msra.mxu0 %v1464
    %2116 = vmatprep.subr.bf16.mxu0 %v1469
    %2117 = vmatpush1.bf16.msra.mxu0 %v1468
    %2118 = vmatprep.subr.bf16.mxu0 %v1473
    %2119 = vmatpush1.bf16.msra.mxu0 %v1472
    %2120 = vmatprep.subr.bf16.mxu0 %v1477
    %2121 = vmatpush1.bf16.msra.mxu0 %v1476
    %2122 = vmatprep.mubr.bf16.mxu0 %v361
    %2123 = vmatmul.mubr.bf16.gmra.mrb[0].mxu0 %v360
    %v2124 = vpop.f32.mrb[0].mxu0
    %v2125 = vadd.f32 %v637, %v2124
    %v2126 = vpop.f32.mrb[0].mxu0
    %v2127 = vadd.f32 %v641, %v2126
    %v2128 = vpop.f32.mrb[0].mxu0
    %v2129 = vpop.f32.mrb[0].mxu0
    %2130 = vdwg.mxu0
    %2131 = vmatprep.subr.bf16.mxu0 %v1481
    %2132 = vmatpush1.bf16.msra.mxu0 %v1480
    %2133 = vmatprep.subr.bf16.mxu0 %v1485
    %2134 = vmatpush1.bf16.msra.mxu0 %v1484
    %2135 = vmatprep.subr.bf16.mxu0 %v1489
    %2136 = vmatpush1.bf16.msra.mxu0 %v1488
    %2137 = vmatprep.subr.bf16.mxu0 %v1493
    %2138 = vmatpush1.bf16.msra.mxu0 %v1492
    %2139 = vmatprep.subr.bf16.mxu0 %v1497
    %2140 = vmatpush1.bf16.msra.mxu0 %v1496
    %2141 = vmatprep.subr.bf16.mxu0 %v1501
    %2142 = vmatpush1.bf16.msra.mxu0 %v1500
    %2143 = vmatprep.subr.bf16.mxu0 %v1505
    %2144 = vmatpush1.bf16.msra.mxu0 %v1504
    %2145 = vmatprep.subr.bf16.mxu0 %v1509
    %2146 = vmatpush1.bf16.msra.mxu0 %v1508
    %2147 = vmatprep.subr.bf16.mxu0 %v1513
    %2148 = vmatpush1.bf16.msra.mxu0 %v1512
    %2149 = vmatprep.subr.bf16.mxu0 %v1517
    %2150 = vmatpush1.bf16.msra.mxu0 %v1516
    %2151 = vmatprep.subr.bf16.mxu0 %v1521
    %2152 = vmatpush1.bf16.msra.mxu0 %v1520
    %2153 = vmatprep.subr.bf16.mxu0 %v1525
    %2154 = vmatpush1.bf16.msra.mxu0 %v1524
    %2155 = vmatprep.subr.bf16.mxu0 %v1529
    %2156 = vmatpush1.bf16.msra.mxu0 %v1528
    %2157 = vmatprep.subr.bf16.mxu0 %v1533
    %2158 = vmatpush1.bf16.msra.mxu0 %v1532
    %2159 = vmatprep.subr.bf16.mxu0 %v1537
    %2160 = vmatpush1.bf16.msra.mxu0 %v1536
    %2161 = vmatprep.subr.bf16.mxu0 %v1541
    %2162 = vmatpush1.bf16.msra.mxu0 %v1540
    %2163 = vmatprep.mubr.bf16.mxu0 %v363
    %2164 = vmatmul.mubr.bf16.gmra.mrb[0].mxu0 %v362
    %v2165 = vpop.f32.mrb[0].mxu0
    %v2166 = vadd.f32 %v2125, %v2165
    %v2167 = vpop.f32.mrb[0].mxu0
    %v2168 = vadd.f32 %v2127, %v2167
    %v2169 = vpop.f32.mrb[0].mxu0
    %v2170 = vpop.f32.mrb[0].mxu0
    %2171 = vdwg.mxu0
    %2172 = vmatprep.subr.bf16.mxu0 %v1545
    %2173 = vmatpush1.bf16.msra.mxu0 %v1544
    %2174 = vmatprep.subr.bf16.mxu0 %v1549
    %2175 = vmatpush1.bf16.msra.mxu0 %v1548
    %2176 = vmatprep.subr.bf16.mxu0 %v1553
    %2177 = vmatpush1.bf16.msra.mxu0 %v1552
    %2178 = vmatprep.subr.bf16.mxu0 %v1557
    %2179 = vmatpush1.bf16.msra.mxu0 %v1556
    %2180 = vmatprep.subr.bf16.mxu0 %v1561
    %2181 = vmatpush1.bf16.msra.mxu0 %v1560
    %2182 = vmatprep.subr.bf16.mxu0 %v1565
    %2183 = vmatpush1.bf16.msra.mxu0 %v1564
    %2184 = vmatprep.subr.bf16.mxu0 %v1569
    %2185 = vmatpush1.bf16.msra.mxu0 %v1568
    %2186 = vmatprep.subr.bf16.mxu0 %v1573
    %2187 = vmatpush1.bf16.msra.mxu0 %v1572
    %2188 = vmatprep.subr.bf16.mxu0 %v1577
    %2189 = vmatpush1.bf16.msra.mxu0 %v1576
    %2190 = vmatprep.subr.bf16.mxu0 %v1581
    %2191 = vmatpush1.bf16.msra.mxu0 %v1580
    %2192 = vmatprep.subr.bf16.mxu0 %v1585
    %2193 = vmatpush1.bf16.msra.mxu0 %v1584
    %2194 = vmatprep.subr.bf16.mxu0 %v1589
    %2195 = vmatpush1.bf16.msra.mxu0 %v1588
    %2196 = vmatprep.subr.bf16.mxu0 %v1593
    %2197 = vmatpush1.bf16.msra.mxu0 %v1592
    %2198 = vmatprep.subr.bf16.mxu0 %v1597
    %2199 = vmatpush1.bf16.msra.mxu0 %v1596
    %2200 = vmatprep.subr.bf16.mxu0 %v1601
    %2201 = vmatpush1.bf16.msra.mxu0 %v1600
    %2202 = vmatprep.subr.bf16.mxu0 %v1605
    %2203 = vmatpush1.bf16.msra.mxu0 %v1604
    %2204 = vmatprep.mubr.bf16.mxu0 %v365
    %2205 = vmatmul.mubr.bf16.gmra.mrb[0].mxu0 %v364
    %v2206 = vpop.f32.mrb[0].mxu0
    %v2207 = vadd.f32 %v2166, %v2206
    %v2208 = vpop.f32.mrb[0].mxu0
    %v2209 = vadd.f32 %v2168, %v2208
    %v2210 = vpop.f32.mrb[0].mxu0
    %v2211 = vpop.f32.mrb[0].mxu0
    %2212 = vdwg.mxu0
    %2213 = vmatprep.subr.bf16.mxu0 %v1609
    %2214 = vmatpush1.bf16.msra.mxu0 %v1608
    %2215 = vmatprep.subr.bf16.mxu0 %v1613
    %2216 = vmatpush1.bf16.msra.mxu0 %v1612
    %2217 = vmatprep.subr.bf16.mxu0 %v1617
    %2218 = vmatpush1.bf16.msra.mxu0 %v1616
    %2219 = vmatprep.subr.bf16.mxu0 %v1621
    %2220 = vmatpush1.bf16.msra.mxu0 %v1620
    %2221 = vmatprep.subr.bf16.mxu0 %v1625
    %2222 = vmatpush1.bf16.msra.mxu0 %v1624
    %2223 = vmatprep.subr.bf16.mxu0 %v1629
    %2224 = vmatpush1.bf16.msra.mxu0 %v1628
    %2225 = vmatprep.subr.bf16.mxu0 %v1633
    %2226 = vmatpush1.bf16.msra.mxu0 %v1632
    %2227 = vmatprep.subr.bf16.mxu0 %v1637
    %2228 = vmatpush1.bf16.msra.mxu0 %v1636
    %2229 = vmatprep.subr.bf16.mxu0 %v1641
    %2230 = vmatpush1.bf16.msra.mxu0 %v1640
    %2231 = vmatprep.subr.bf16.mxu0 %v1645
    %2232 = vmatpush1.bf16.msra.mxu0 %v1644
    %2233 = vmatprep.subr.bf16.mxu0 %v1649
    %2234 = vmatpush1.bf16.msra.mxu0 %v1648
    %2235 = vmatprep.subr.bf16.mxu0 %v1653
    %2236 = vmatpush1.bf16.msra.mxu0 %v1652
    %2237 = vmatprep.subr.bf16.mxu0 %v1657
    %2238 = vmatpush1.bf16.msra.mxu0 %v1656
    %2239 = vmatprep.subr.bf16.mxu0 %v1661
    %2240 = vmatpush1.bf16.msra.mxu0 %v1660
    %2241 = vmatprep.subr.bf16.mxu0 %v1665
    %2242 = vmatpush1.bf16.msra.mxu0 %v1664
    %2243 = vmatprep.subr.bf16.mxu0 %v1669
    %2244 = vmatpush1.bf16.msra.mxu0 %v1668
    %2245 = vmatprep.mubr.bf16.mxu0 %v367
    %2246 = vmatmul.mubr.bf16.gmra.mrb[0].mxu0 %v366
    %v2247 = vpop.f32.mrb[0].mxu0
    %v2248 = vadd.f32 %v2207, %v2247
    %v2249 = vpop.f32.mrb[0].mxu0
    %v2250 = vadd.f32 %v2209, %v2249
    %v2251 = vpop.f32.mrb[0].mxu0
    %v2252 = vpop.f32.mrb[0].mxu0
    %2253 = vdwg.mxu0
    %v2254 = vmax.f32 %v2084, 0.0
    %v2255 = vmax.f32 %v2086, 0.0
    %v2256 = vmax.f32 %v2248, 0.0
    %v2257 = vmax.f32 %v2250, 0.0
    %v2258 = vpack.c.bf16 %v2254, %v2254
    %v2259 = vpack.c.bf16 %v2255, %v2255
    %v2260 = vpack.c.bf16 %v2256, %v2256
    %v2261 = vpack.c.bf16 %v2257, %v2257
    %v2262 = vld [vmem:[#allocation10] sm:$0xf]
    %v2263 = vld [vmem:[#allocation10 + $0x4] sm:$0xf]
    %v2264 = vld [vmem:[#allocation10 + $0x8] sm:$0xf]
    %v2265 = vld [vmem:[#allocation10 + $0xc] sm:$0xf]
    %v2266 = vld [vmem:[#allocation10 + $0x10] sm:$0xf]
    %v2267 = vld [vmem:[#allocation10 + $0x14] sm:$0xf]
    %v2268 = vld [vmem:[#allocation10 + $0x18] sm:$0xf]
    %v2269 = vld [vmem:[#allocation10 + $0x1c] sm:$0xf]
    %v2270 = vld [vmem:[#allocation10 + $0x20] sm:$0xf]
    %v2271 = vld [vmem:[#allocation10 + $0x24] sm:$0xf]
    %v2272 = vld [vmem:[#allocation10 + $0x28] sm:$0xf]
    %v2273 = vld [vmem:[#allocation10 + $0x2c] sm:$0xf]
    %v2274 = vld [vmem:[#allocation10 + $0x30] sm:$0xf]
    %v2275 = vld [vmem:[#allocation10 + $0x34] sm:$0xf]
    %v2276 = vld [vmem:[#allocation10 + $0x38] sm:$0xf]
    %v2277 = vld [vmem:[#allocation10 + $0x3c] sm:$0xf]
    %v2278 = vld [vmem:[#allocation10 + $0x40] sm:$0xf]
    %v2279 = vld [vmem:[#allocation10 + $0x44] sm:$0xf]
    %v2280 = vld [vmem:[#allocation10 + $0x48] sm:$0xf]
    %v2281 = vld [vmem:[#allocation10 + $0x4c] sm:$0xf]
    %v2282 = vld [vmem:[#allocation10 + $0x50] sm:$0xf]
    %v2283 = vld [vmem:[#allocation10 + $0x54] sm:$0xf]
    %v2284 = vld [vmem:[#allocation10 + $0x58] sm:$0xf]
    %v2285 = vld [vmem:[#allocation10 + $0x5c] sm:$0xf]
    %v2286 = vld [vmem:[#allocation10 + $0x60] sm:$0xf]
    %v2287 = vld [vmem:[#allocation10 + $0x64] sm:$0xf]
    %v2288 = vld [vmem:[#allocation10 + $0x68] sm:$0xf]
    %v2289 = vld [vmem:[#allocation10 + $0x6c] sm:$0xf]
    %v2290 = vld [vmem:[#allocation10 + $0x70] sm:$0xf]
    %v2291 = vld [vmem:[#allocation10 + $0x74] sm:$0xf]
    %v2292 = vld [vmem:[#allocation10 + $0x78] sm:$0xf]
    %v2293 = vld [vmem:[#allocation10 + $0x7c] sm:$0xf]
    %v2294 = vld [vmem:[#allocation10 + $0x80] sm:$0xf]
    %v2295 = vld [vmem:[#allocation10 + $0x84] sm:$0xf]
    %v2296 = vld [vmem:[#allocation10 + $0x88] sm:$0xf]
    %v2297 = vld [vmem:[#allocation10 + $0x8c] sm:$0xf]
    %v2298 = vld [vmem:[#allocation10 + $0x90] sm:$0xf]
    %v2299 = vld [vmem:[#allocation10 + $0x94] sm:$0xf]
    %v2300 = vld [vmem:[#allocation10 + $0x98] sm:$0xf]
    %v2301 = vld [vmem:[#allocation10 + $0x9c] sm:$0xf]
    %v2302 = vld [vmem:[#allocation10 + $0xa0] sm:$0xf]
    %v2303 = vld [vmem:[#allocation10 + $0xa4] sm:$0xf]
    %v2304 = vld [vmem:[#allocation10 + $0xa8] sm:$0xf]
    %v2305 = vld [vmem:[#allocation10 + $0xac] sm:$0xf]
    %v2306 = vld [vmem:[#allocation10 + $0xb0] sm:$0xf]
    %v2307 = vld [vmem:[#allocation10 + $0xb4] sm:$0xf]
    %v2308 = vld [vmem:[#allocation10 + $0xb8] sm:$0xf]
    %v2309 = vld [vmem:[#allocation10 + $0xbc] sm:$0xf]
    %v2310 = vld [vmem:[#allocation10 + $0xc0] sm:$0xf]
    %v2311 = vld [vmem:[#allocation10 + $0xc4] sm:$0xf]
    %v2312 = vld [vmem:[#allocation10 + $0xc8] sm:$0xf]
    %v2313 = vld [vmem:[#allocation10 + $0xcc] sm:$0xf]
    %v2314 = vld [vmem:[#allocation10 + $0xd0] sm:$0xf]
    %v2315 = vld [vmem:[#allocation10 + $0xd4] sm:$0xf]
    %v2316 = vld [vmem:[#allocation10 + $0xd8] sm:$0xf]
    %v2317 = vld [vmem:[#allocation10 + $0xdc] sm:$0xf]
    %v2318 = vld [vmem:[#allocation10 + $0xe0] sm:$0xf]
    %v2319 = vld [vmem:[#allocation10 + $0xe4] sm:$0xf]
    %v2320 = vld [vmem:[#allocation10 + $0xe8] sm:$0xf]
    %v2321 = vld [vmem:[#allocation10 + $0xec] sm:$0xf]
    %v2322 = vld [vmem:[#allocation10 + $0xf0] sm:$0xf]
    %v2323 = vld [vmem:[#allocation10 + $0xf4] sm:$0xf]
    %v2324 = vld [vmem:[#allocation10 + $0xf8] sm:$0xf]
    %v2325 = vld [vmem:[#allocation10 + $0xfc] sm:$0xf]
    %v2326 = vld [vmem:[%s6] sm:$0x1]
    %v2328 = vlaneseq
    %v2329 = vshrl.u32 %v2328, 7
    %v2330 = vsub.s32 0, %v2329
    %v2331 = vrot.slane %v2326, %v2330
    %v2397 = vunpack.c.l.b16 %v2262
    %v2398 = vunpack.c.l.b16 %v2263
    %v2399 = vunpack.c.l.b16 %v2264
    %v2400 = vunpack.c.l.b16 %v2265
    %v2401 = vunpack.c.l.b16 %v2266
    %v2402 = vunpack.c.l.b16 %v2267
    %v2403 = vunpack.c.l.b16 %v2268
    %v2404 = vunpack.c.l.b16 %v2269
    %v2405 = vunpack.c.l.b16 %v2270
    %v2406 = vunpack.c.l.b16 %v2271
    %v2407 = vunpack.c.l.b16 %v2272
    %v2408 = vunpack.c.l.b16 %v2273
    %v2409 = vunpack.c.l.b16 %v2274
    %v2410 = vunpack.c.l.b16 %v2275
    %v2411 = vunpack.c.l.b16 %v2276
    %v2412 = vunpack.c.l.b16 %v2277
    %v2413 = vunpack.c.l.b16 %v2278
    %v2414 = vunpack.c.l.b16 %v2279
    %v2415 = vunpack.c.l.b16 %v2280
    %v2416 = vunpack.c.l.b16 %v2281
    %v2417 = vunpack.c.l.b16 %v2282
    %v2418 = vunpack.c.l.b16 %v2283
    %v2419 = vunpack.c.l.b16 %v2284
    %v2420 = vunpack.c.l.b16 %v2285
    %v2421 = vunpack.c.l.b16 %v2286
    %v2422 = vunpack.c.l.b16 %v2287
    %v2423 = vunpack.c.l.b16 %v2288
    %v2424 = vunpack.c.l.b16 %v2289
    %v2425 = vunpack.c.l.b16 %v2290
    %v2426 = vunpack.c.l.b16 %v2291
    %v2427 = vunpack.c.l.b16 %v2292
    %v2428 = vunpack.c.l.b16 %v2293
    %v2429 = vunpack.c.l.b16 %v2294
    %v2430 = vunpack.c.l.b16 %v2295
    %v2431 = vunpack.c.l.b16 %v2296
    %v2432 = vunpack.c.l.b16 %v2297
    %v2433 = vunpack.c.l.b16 %v2298
    %v2434 = vunpack.c.l.b16 %v2299
    %v2435 = vunpack.c.l.b16 %v2300
    %v2436 = vunpack.c.l.b16 %v2301
    %v2437 = vunpack.c.l.b16 %v2302
    %v2438 = vunpack.c.l.b16 %v2303
    %v2439 = vunpack.c.l.b16 %v2304
    %v2440 = vunpack.c.l.b16 %v2305
    %v2441 = vunpack.c.l.b16 %v2306
    %v2442 = vunpack.c.l.b16 %v2307
    %v2443 = vunpack.c.l.b16 %v2308
    %v2444 = vunpack.c.l.b16 %v2309
    %v2445 = vunpack.c.l.b16 %v2310
    %v2446 = vunpack.c.l.b16 %v2311
    %v2447 = vunpack.c.l.b16 %v2312
    %v2448 = vunpack.c.l.b16 %v2313
    %v2449 = vunpack.c.l.b16 %v2314
    %v2450 = vunpack.c.l.b16 %v2315
    %v2451 = vunpack.c.l.b16 %v2316
    %v2452 = vunpack.c.l.b16 %v2317
    %v2453 = vunpack.c.l.b16 %v2318
    %v2454 = vunpack.c.l.b16 %v2319
    %v2455 = vunpack.c.l.b16 %v2320
    %v2456 = vunpack.c.l.b16 %v2321
    %v2457 = vunpack.c.l.b16 %v2322
    %v2458 = vunpack.c.l.b16 %v2323
    %v2459 = vunpack.c.l.b16 %v2324
    %v2460 = vunpack.c.l.b16 %v2325
    %v2461 = vpack.c.b16 %v2398, %v2397
    %v2462 = vpack.c.b16 %v2400, %v2399
    %v2463 = vpack.c.b16 %v2402, %v2401
    %v2464 = vpack.c.b16 %v2404, %v2403
    %v2465 = vpack.c.b16 %v2406, %v2405
    %v2466 = vpack.c.b16 %v2408, %v2407
    %v2467 = vpack.c.b16 %v2410, %v2409
    %v2468 = vpack.c.b16 %v2412, %v2411
    %v2469 = vpack.c.b16 %v2414, %v2413
    %v2470 = vpack.c.b16 %v2416, %v2415
    %v2471 = vpack.c.b16 %v2418, %v2417
    %v2472 = vpack.c.b16 %v2420, %v2419
    %v2473 = vpack.c.b16 %v2422, %v2421
    %v2474 = vpack.c.b16 %v2424, %v2423
    %v2475 = vpack.c.b16 %v2426, %v2425
    %v2476 = vpack.c.b16 %v2428, %v2427
    %v2477 = vpack.c.b16 %v2430, %v2429
    %v2478 = vpack.c.b16 %v2432, %v2431
    %v2479 = vpack.c.b16 %v2434, %v2433
    %v2480 = vpack.c.b16 %v2436, %v2435
    %v2481 = vpack.c.b16 %v2438, %v2437
    %v2482 = vpack.c.b16 %v2440, %v2439
    %v2483 = vpack.c.b16 %v2442, %v2441
    %v2484 = vpack.c.b16 %v2444, %v2443
    %v2485 = vpack.c.b16 %v2446, %v2445
    %v2486 = vpack.c.b16 %v2448, %v2447
    %v2487 = vpack.c.b16 %v2450, %v2449
    %v2488 = vpack.c.b16 %v2452, %v2451
    %v2489 = vpack.c.b16 %v2454, %v2453
    %v2490 = vpack.c.b16 %v2456, %v2455
    %v2491 = vpack.c.b16 %v2458, %v2457
    %v2492 = vpack.c.b16 %v2460, %v2459
    %2525 = vmatprep.subr.bf16.mxu0 0
    %2526 = vmatpush1.bf16.msra.mxu0 %v2461
    %2527 = vmatprep.subr.bf16.mxu0 0
    %2528 = vmatpush1.bf16.msra.mxu0 %v2462
    %2529 = vmatprep.subr.bf16.mxu0 0
    %2530 = vmatpush1.bf16.msra.mxu0 %v2463
    %2531 = vmatprep.subr.bf16.mxu0 0
    %2532 = vmatpush1.bf16.msra.mxu0 %v2464
    %2533 = vmatprep.subr.bf16.mxu0 0
    %2534 = vmatpush1.bf16.msra.mxu0 %v2465
    %2535 = vmatprep.subr.bf16.mxu0 0
    %2536 = vmatpush1.bf16.msra.mxu0 %v2466
    %2537 = vmatprep.subr.bf16.mxu0 0
    %2538 = vmatpush1.bf16.msra.mxu0 %v2467
    %2539 = vmatprep.subr.bf16.mxu0 0
    %2540 = vmatpush1.bf16.msra.mxu0 %v2468
    %2541 = vmatprep.subr.bf16.mxu0 0
    %2542 = vmatpush1.bf16.msra.mxu0 %v2469
    %2543 = vmatprep.subr.bf16.mxu0 0
    %2544 = vmatpush1.bf16.msra.mxu0 %v2470
    %2545 = vmatprep.subr.bf16.mxu0 0
    %2546 = vmatpush1.bf16.msra.mxu0 %v2471
    %2547 = vmatprep.subr.bf16.mxu0 0
    %2548 = vmatpush1.bf16.msra.mxu0 %v2472
    %2549 = vmatprep.subr.bf16.mxu0 0
    %2550 = vmatpush1.bf16.msra.mxu0 %v2473
    %2551 = vmatprep.subr.bf16.mxu0 0
    %2552 = vmatpush1.bf16.msra.mxu0 %v2474
    %2553 = vmatprep.subr.bf16.mxu0 0
    %2554 = vmatpush1.bf16.msra.mxu0 %v2475
    %2555 = vmatprep.subr.bf16.mxu0 0
    %2556 = vmatpush1.bf16.msra.mxu0 %v2476
    %2557 = vmatprep.mubr.bf16.mxu0 %v2259
    %2558 = vmatmul.mubr.bf16.gmra.mrb[0].mxu0 %v2258
    %v2559 = vpop.f32.mrb[0].mxu0
    %v2560 = vadd.f32 %v2331, %v2559
    %v2561 = vpop.f32.mrb[0].mxu0
    %v2562 = vpop.f32.mrb[0].mxu0
    %v2563 = vpop.f32.mrb[0].mxu0
    %2564 = vdwg.mxu0
    %2565 = vmatprep.subr.bf16.mxu0 0
    %2566 = vmatpush1.bf16.msra.mxu0 %v2477
    %2567 = vmatprep.subr.bf16.mxu0 0
    %2568 = vmatpush1.bf16.msra.mxu0 %v2478
    %2569 = vmatprep.subr.bf16.mxu0 0
    %2570 = vmatpush1.bf16.msra.mxu0 %v2479
    %2571 = vmatprep.subr.bf16.mxu0 0
    %2572 = vmatpush1.bf16.msra.mxu0 %v2480
    %2573 = vmatprep.subr.bf16.mxu0 0
    %2574 = vmatpush1.bf16.msra.mxu0 %v2481
    %2575 = vmatprep.subr.bf16.mxu0 0
    %2576 = vmatpush1.bf16.msra.mxu0 %v2482
    %2577 = vmatprep.subr.bf16.mxu0 0
    %2578 = vmatpush1.bf16.msra.mxu0 %v2483
    %2579 = vmatprep.subr.bf16.mxu0 0
    %2580 = vmatpush1.bf16.msra.mxu0 %v2484
    %2581 = vmatprep.subr.bf16.mxu0 0
    %2582 = vmatpush1.bf16.msra.mxu0 %v2485
    %2583 = vmatprep.subr.bf16.mxu0 0
    %2584 = vmatpush1.bf16.msra.mxu0 %v2486
    %2585 = vmatprep.subr.bf16.mxu0 0
    %2586 = vmatpush1.bf16.msra.mxu0 %v2487
    %2587 = vmatprep.subr.bf16.mxu0 0
    %2588 = vmatpush1.bf16.msra.mxu0 %v2488
    %2589 = vmatprep.subr.bf16.mxu0 0
    %2590 = vmatpush1.bf16.msra.mxu0 %v2489
    %2591 = vmatprep.subr.bf16.mxu0 0
    %2592 = vmatpush1.bf16.msra.mxu0 %v2490
    %2593 = vmatprep.subr.bf16.mxu0 0
    %2594 = vmatpush1.bf16.msra.mxu0 %v2491
    %2595 = vmatprep.subr.bf16.mxu0 0
    %2596 = vmatpush1.bf16.msra.mxu0 %v2492
    %2597 = vmatprep.mubr.bf16.mxu0 %v2261
    %2598 = vmatmul.mubr.bf16.gmra.mrb[0].mxu0 %v2260
    %v2599 = vpop.f32.mrb[0].mxu0
    %v2600 = vadd.f32 %v2560, %v2599
    %v2601 = vpop.f32.mrb[0].mxu0
    %v2602 = vpop.f32.mrb[0].mxu0
    %v2603 = vpop.f32.mrb[0].mxu0
    %2604 = vdwg.mxu0
    %2605 = vst [vmem:[#allocation11] sm:$0xff] %v2600
    // Predicated region
    $region50: #{tpu_custom_call.1} parent=1 // pred_check
      _
    $region51: #{tpu_custom_call.1} parent=1 // pred_check_branch
      %2607 = sbr.rel (0) target = $region53
    $region52: #{tpu_custom_call.1} parent=1 // pred_region
      %s2609 = ssub.s32 128, 128
      %2610 = vsyncadd [#allocation4], %s2609
      %s2612 = sshll.u32 [#allocation11], 4
      %s2613 = int_to_ptr.vmem [resolvable:$true] %s2612
      %2615 = dma.vmem_to_hbm [thread:$0]  %s2613, 128, %s7, [#allocation4]
    $region53: #{tpu_custom_call.1} parent=1 // pred_fallthru
      _
    // Predicated region
    $region54: #{tpu_custom_call.1} parent=1 // pred_check
      _
    $region55: #{tpu_custom_call.1} parent=1 // pred_check_branch
      %2617 = sbr.rel (0) target = $region57
    $region56: #{tpu_custom_call.1} parent=1 // pred_region
      %2618 = dma.done [#allocation4], 128
    $region57: #{tpu_custom_call.1} parent=1 // pred_fallthru
      _
    %2619 = vsyncpa [#allocation3], 1
    %2620 = vsyncpa [#allocation6], 1
    %2621 = vsyncpa [#allocation9], 1
    %2622 = vsyncpa [#allocation4], 1

</llo_original>
